<compile_context>
chip_gen: v6e
topology: v6e:2x2x1
jax: 0.10.0
libtpu: 0.0.40
codegen_flags: <defaults>
</compile_context>

<pallas_src>
import math
from functools import partial

import jax
import jax.numpy as jnp
import numpy as np
from jax.experimental import pallas as pl
from jax.experimental.pallas import tpu as pltpu


DEFAULT_TOKENS_PER_STEP = 256  # review: 128-512; pack-aligned below


def _round_up(x: int, m: int) -> int:
    return -(-x // m) * m


def embedding_kernel(ids_ref, lut_hbm, out_ref, row_buf, sems, *,
                     tokens_per_step: int, inner: int, scale: float):
    """One block of `tokens_per_step` tokens per grid step, double-buffered.

    ids_ref  : (n_padded,) int32 token ids in SMEM (scalar prefetch)
    lut_hbm  : (vocab, d_model) lookup table, left in HBM (pl.ANY)
    out_ref  : (tokens_per_step, d_model) VMEM output tile
    row_buf  : (2 * tokens_per_step, d_model) VMEM gather scratch (2 slots)
    sems     : (2,) DMA semaphores, one shared per slot
    """
    i = pl.program_id(1)                      # inner ("arbitrary") step
    blk = pl.program_id(0) * inner + i        # global token-block index
    slot = i & 1                              # slot parity within the chunk

    def issue_block(block_idx, dst_slot):
        ids_base = block_idx * tokens_per_step
        buf_base = dst_slot * tokens_per_step
        for j in range(tokens_per_step):      # static unroll (LLO visibility)
            tok = ids_ref[ids_base + j]       # SMEM scalar read
            pltpu.make_async_copy(
                lut_hbm.at[pl.ds(tok, 1), :],             # (1, d_model) HBM row
                row_buf.at[pl.ds(buf_base + j, 1), :],    # (1, d_model) slot row
                sems.at[dst_slot],                        # shared sem per slot
            ).start()

    # Prime: the first inner step of every outer chunk gathers its own block.
    @pl.when(i == 0)
    def _prime():
        issue_block(blk, slot)

    # Cross-step prefetch: issue the NEXT block's row DMAs before any wait on
    # the current block (next ids are read from SMEM ahead of the waits).
    @pl.when(i + 1 < inner)
    def _prefetch():
        issue_block(blk + 1, 1 - slot)

    # Wait for the current block: one wait per issued row copy on the shared
    # per-slot semaphore (all copies have identical (1, d_model) size).
    for _ in range(tokens_per_step):
        pltpu.make_async_copy(
            lut_hbm.at[pl.ds(0, 1), :],
            row_buf.at[pl.ds(0, 1), :],
            sems.at[slot],
        ).wait()

    # Scale (accumulate in f32) and store the full lane/sublane-dense block.
    start = pl.multiple_of(slot * tokens_per_step, tokens_per_step)
    rows = row_buf[pl.ds(start, tokens_per_step), :].astype(jnp.float32)
    out_ref[...] = (rows * scale).astype(out_ref.dtype)


def embeddings(ids, lut, *, tokens_per_step: int | None = None):
    """JAX wrapper: out[..., :] = lut[ids] * sqrt(d_model)."""
    vocab, d_model = lut.shape
    orig_shape = ids.shape
    dtype = lut.dtype
    itemsize = jnp.dtype(dtype).itemsize
    pack = {4: 8, 2: 16, 1: 32}.get(itemsize, 8)   # sublane pack per dtype

    # Clamp ids so a bad index can never become an out-of-bounds HBM DMA.
    flat = jnp.clip(ids.reshape(-1).astype(jnp.int32), 0, vocab - 1)
    n_tokens = flat.shape[0]

    # --- choose tokens_per_step -------------------------------------------
    tps = DEFAULT_TOKENS_PER_STEP if tokens_per_step is None else tokens_per_step
    tps = min(tps, _round_up(n_tokens, pack))      # don't gather mostly padding
    tps = max(pack, _round_up(tps, pack))          # sublane-pack aligned
    # Keep 2-slot gather scratch + double-buffered output block <= ~24 MiB
    # (v7x-safe budget; v5e/v6e have more VMEM but this is plenty to hit BW).
    budget = 24 * 1024 * 1024
    max_tps = max(pack, (budget // (4 * d_model * itemsize)) // pack * pack)
    tps = min(tps, max_tps)

    # --- grid: outer "parallel" (megacore) x inner "arbitrary" (prefetch) ---
    n_blocks = -(-n_tokens // tps)
    outer = 2 if n_blocks >= 2 else 1
    inner = -(-n_blocks // outer)
    n_padded = outer * inner * tps
    if n_padded != n_tokens:
        flat = jnp.pad(flat, (0, n_padded - n_tokens))   # pad with token 0

    scale = math.sqrt(d_model)

    vmem_needed = 4 * tps * d_model * itemsize   # 2-slot scratch + 2x out bufs
    vmem_limit = int(min(48 * 1024 * 1024,
                         max(32 * 1024 * 1024, 1.5 * vmem_needed)))

    cost = pl.CostEstimate(
        flops=n_padded * d_model,                          # the scale multiply
        transcendentals=0,
        bytes_accessed=2 * n_padded * d_model * itemsize + n_padded * 4,
    )

    out = pl.pallas_call(
        partial(embedding_kernel, tokens_per_step=tps, inner=inner, scale=scale),
        out_shape=jax.ShapeDtypeStruct((n_padded, d_model), dtype),
        grid_spec=pltpu.PrefetchScalarGridSpec(
            num_scalar_prefetch=1,
            grid=(outer, inner),
            in_specs=[pl.BlockSpec(memory_space=pl.ANY)],   # LUT stays in HBM
            out_specs=pl.BlockSpec((tps, d_model),
                                   lambda o, i, ids: (o * inner + i, 0)),
            scratch_shapes=[
                pltpu.VMEM((2 * tps, d_model), dtype),      # 2-slot gather buf
                pltpu.SemaphoreType.DMA((2,)),              # one sem per slot
            ],
        ),
        compiler_params=pltpu.CompilerParams(
            dimension_semantics=("parallel", "arbitrary"),
            vmem_limit_bytes=vmem_limit,
        ),
        cost_estimate=cost,
    )(flat, lut)

    out = out[:n_tokens]
    return out.reshape(*orig_shape, d_model)


def reference_embeddings(ids, lut):
    """Pure-JAX reference matching the PyTorch module."""
    return jnp.take(lut, ids, axis=0) * math.sqrt(lut.shape[1])


if __name__ == "__main__":
    # Shapes consistent with the module: batch=2, seq=8, vocab=512, d_model=128.
    B, S, VOCAB, D = 2, 8, 512, 128

    key = jax.random.PRNGKey(0)
    k_ids, k_lut, k_ids2 = jax.random.split(key, 3)

    ids = jax.random.randint(k_ids, (B, S), 0, VOCAB, dtype=jnp.int32)
    lut = jax.random.normal(k_lut, (VOCAB, D), jnp.float32)

    out = jax.block_until_ready(embeddings(ids, lut))
    ref = reference_embeddings(ids, lut)
    np.testing.assert_allclose(np.asarray(out), np.asarray(ref),
                               rtol=1e-6, atol=1e-6)

    # Second small case exercising the double-buffered multi-block path:
    # 320 tokens, 32 per step -> grid (outer=2 parallel, inner=5 arbitrary).
    ids2 = jax.random.randint(k_ids2, (4, 80), 0, VOCAB, dtype=jnp.int32)
    out2 = jax.block_until_ready(embeddings(ids2, lut, tokens_per_step=32))
    ref2 = reference_embeddings(ids2, lut)
    np.testing.assert_allclose(np.asarray(out2), np.asarray(ref2),
                               rtol=1e-6, atol=1e-6)

    print("KERNEL_OK")
</pallas_src>

<mosaic_0001>
module attributes {stable_mosaic.version = 11 : i64} {
  func.func @embedding_kernel(%arg0: i32, %arg1: i32, %arg2: memref<16xi32, #tpu.memory_space<smem>>, %arg3: memref<512x128xf32, #tpu.memory_space<any>>, %arg4: memref<16x128xf32, #tpu.memory_space<vmem>>, %arg5: memref<32x128xf32, #tpu.memory_space<vmem>>, %arg6: memref<2x!tpu.dma_semaphore, #tpu.memory_space<semaphore_mem>>) attributes {dimension_semantics = [#tpu.dimension_semantics<parallel>, #tpu.dimension_semantics<arbitrary>], iteration_bounds = array<i64: 1, 1>, scalar_prefetch = 1 : i64, scratch_operands = 2 : i64, tpu.core_type = #tpu.core_type<tc>, window_params = [{}, {transform_indices = @transform_1, window_bounds = array<i64: 16, 128>}]} {
    %c1_i32 = arith.constant 1 : i32
    %0 = arith.muli %arg0, %c1_i32 : i32
    %1 = arith.addi %0, %arg1 : i32
    %c1_i32_0 = arith.constant 1 : i32
    %2 = arith.andi %arg1, %c1_i32_0 : i32
    %c0_i32 = arith.constant 0 : i32
    %3 = arith.cmpi eq, %arg1, %c0_i32 : i32
    %4 = arith.extui %3 : i1 to i32
    %c0_i32_1 = arith.constant 0 : i32
    %5 = arith.cmpi ne, %4, %c0_i32_1 : i32
    scf.if %5 {
      %c16_i32_71 = arith.constant 16 : i32
      %81 = arith.muli %1, %c16_i32_71 : i32
      %c16_i32_72 = arith.constant 16 : i32
      %82 = arith.muli %2, %c16_i32_72 : i32
      %c0_i32_73 = arith.constant 0 : i32
      %83 = arith.addi %81, %c0_i32_73 : i32
      %84 = arith.index_cast %83 : i32 to index
      %85 = memref.load %arg2[%84] : memref<16xi32, #tpu.memory_space<smem>>
      %c0_i32_74 = arith.constant 0 : i32
      %86 = arith.addi %82, %c0_i32_74 : i32
      %c0_i32_75 = arith.constant 0 : i32
      %87 = tpu.memref_slice %arg3[%85, %c0_i32_75] : memref<512x128xf32, #tpu.memory_space<any>> -> memref<1x128xf32, #tpu.memory_space<any>>
      %c0_i32_76 = arith.constant 0 : i32
      %88 = tpu.memref_slice %arg5[%86, %c0_i32_76] : memref<32x128xf32, #tpu.memory_space<vmem>> -> memref<1x128xf32, #tpu.memory_space<vmem>>
      %89 = tpu.memref_slice %arg6[%2] : memref<2x!tpu.dma_semaphore, #tpu.memory_space<semaphore_mem>> -> memref<1x!tpu.dma_semaphore, #tpu.memory_space<semaphore_mem>>
      %90 = tpu.memref_squeeze %89 : memref<1x!tpu.dma_semaphore, #tpu.memory_space<semaphore_mem>> -> memref<!tpu.dma_semaphore, #tpu.memory_space<semaphore_mem>>
      tpu.enqueue_dma source(%87 : memref<1x128xf32, #tpu.memory_space<any>>) target(%88 : memref<1x128xf32, #tpu.memory_space<vmem>>) target_semaphore(%90 : memref<!tpu.dma_semaphore, #tpu.memory_space<semaphore_mem>>)
      %c1_i32_77 = arith.constant 1 : i32
      %91 = arith.addi %81, %c1_i32_77 : i32
      %92 = arith.index_cast %91 : i32 to index
      %93 = memref.load %arg2[%92] : memref<16xi32, #tpu.memory_space<smem>>
      %c1_i32_78 = arith.constant 1 : i32
      %94 = arith.addi %82, %c1_i32_78 : i32
      %c0_i32_79 = arith.constant 0 : i32
      %95 = tpu.memref_slice %arg3[%93, %c0_i32_79] : memref<512x128xf32, #tpu.memory_space<any>> -> memref<1x128xf32, #tpu.memory_space<any>>
      %c0_i32_80 = arith.constant 0 : i32
      %96 = tpu.memref_slice %arg5[%94, %c0_i32_80] : memref<32x128xf32, #tpu.memory_space<vmem>> -> memref<1x128xf32, #tpu.memory_space<vmem>>
      %97 = tpu.memref_slice %arg6[%2] : memref<2x!tpu.dma_semaphore, #tpu.memory_space<semaphore_mem>> -> memref<1x!tpu.dma_semaphore, #tpu.memory_space<semaphore_mem>>
      %98 = tpu.memref_squeeze %97 : memref<1x!tpu.dma_semaphore, #tpu.memory_space<semaphore_mem>> -> memref<!tpu.dma_semaphore, #tpu.memory_space<semaphore_mem>>
      tpu.enqueue_dma source(%95 : memref<1x128xf32, #tpu.memory_space<any>>) target(%96 : memref<1x128xf32, #tpu.memory_space<vmem>>) target_semaphore(%98 : memref<!tpu.dma_semaphore, #tpu.memory_space<semaphore_mem>>)
      %c2_i32 = arith.constant 2 : i32
      %99 = arith.addi %81, %c2_i32 : i32
      %100 = arith.index_cast %99 : i32 to index
      %101 = memref.load %arg2[%100] : memref<16xi32, #tpu.memory_space<smem>>
      %c2_i32_81 = arith.constant 2 : i32
      %102 = arith.addi %82, %c2_i32_81 : i32
      %c0_i32_82 = arith.constant 0 : i32
      %103 = tpu.memref_slice %arg3[%101, %c0_i32_82] : memref<512x128xf32, #tpu.memory_space<any>> -> memref<1x128xf32, #tpu.memory_space<any>>
      %c0_i32_83 = arith.constant 0 : i32
      %104 = tpu.memref_slice %arg5[%102, %c0_i32_83] : memref<32x128xf32, #tpu.memory_space<vmem>> -> memref<1x128xf32, #tpu.memory_space<vmem>>
      %105 = tpu.memref_slice %arg6[%2] : memref<2x!tpu.dma_semaphore, #tpu.memory_space<semaphore_mem>> -> memref<1x!tpu.dma_semaphore, #tpu.memory_space<semaphore_mem>>
      %106 = tpu.memref_squeeze %105 : memref<1x!tpu.dma_semaphore, #tpu.memory_space<semaphore_mem>> -> memref<!tpu.dma_semaphore, #tpu.memory_space<semaphore_mem>>
      tpu.enqueue_dma source(%103 : memref<1x128xf32, #tpu.memory_space<any>>) target(%104 : memref<1x128xf32, #tpu.memory_space<vmem>>) target_semaphore(%106 : memref<!tpu.dma_semaphore, #tpu.memory_space<semaphore_mem>>)
      %c3_i32 = arith.constant 3 : i32
      %107 = arith.addi %81, %c3_i32 : i32
      %108 = arith.index_cast %107 : i32 to index
      %109 = memref.load %arg2[%108] : memref<16xi32, #tpu.memory_space<smem>>
      %c3_i32_84 = arith.constant 3 : i32
      %110 = arith.addi %82, %c3_i32_84 : i32
      %c0_i32_85 = arith.constant 0 : i32
      %111 = tpu.memref_slice %arg3[%109, %c0_i32_85] : memref<512x128xf32, #tpu.memory_space<any>> -> memref<1x128xf32, #tpu.memory_space<any>>
      %c0_i32_86 = arith.constant 0 : i32
      %112 = tpu.memref_slice %arg5[%110, %c0_i32_86] : memref<32x128xf32, #tpu.memory_space<vmem>> -> memref<1x128xf32, #tpu.memory_space<vmem>>
      %113 = tpu.memref_slice %arg6[%2] : memref<2x!tpu.dma_semaphore, #tpu.memory_space<semaphore_mem>> -> memref<1x!tpu.dma_semaphore, #tpu.memory_space<semaphore_mem>>
      %114 = tpu.memref_squeeze %113 : memref<1x!tpu.dma_semaphore, #tpu.memory_space<semaphore_mem>> -> memref<!tpu.dma_semaphore, #tpu.memory_space<semaphore_mem>>
      tpu.enqueue_dma source(%111 : memref<1x128xf32, #tpu.memory_space<any>>) target(%112 : memref<1x128xf32, #tpu.memory_space<vmem>>) target_semaphore(%114 : memref<!tpu.dma_semaphore, #tpu.memory_space<semaphore_mem>>)
      %c4_i32 = arith.constant 4 : i32
      %115 = arith.addi %81, %c4_i32 : i32
      %116 = arith.index_cast %115 : i32 to index
      %117 = memref.load %arg2[%116] : memref<16xi32, #tpu.memory_space<smem>>
      %c4_i32_87 = arith.constant 4 : i32
      %118 = arith.addi %82, %c4_i32_87 : i32
      %c0_i32_88 = arith.constant 0 : i32
      %119 = tpu.memref_slice %arg3[%117, %c0_i32_88] : memref<512x128xf32, #tpu.memory_space<any>> -> memref<1x128xf32, #tpu.memory_space<any>>
      %c0_i32_89 = arith.constant 0 : i32
      %120 = tpu.memref_slice %arg5[%118, %c0_i32_89] : memref<32x128xf32, #tpu.memory_space<vmem>> -> memref<1x128xf32, #tpu.memory_space<vmem>>
      %121 = tpu.memref_slice %arg6[%2] : memref<2x!tpu.dma_semaphore, #tpu.memory_space<semaphore_mem>> -> memref<1x!tpu.dma_semaphore, #tpu.memory_space<semaphore_mem>>
      %122 = tpu.memref_squeeze %121 : memref<1x!tpu.dma_semaphore, #tpu.memory_space<semaphore_mem>> -> memref<!tpu.dma_semaphore, #tpu.memory_space<semaphore_mem>>
      tpu.enqueue_dma source(%119 : memref<1x128xf32, #tpu.memory_space<any>>) target(%120 : memref<1x128xf32, #tpu.memory_space<vmem>>) target_semaphore(%122 : memref<!tpu.dma_semaphore, #tpu.memory_space<semaphore_mem>>)
      %c5_i32 = arith.constant 5 : i32
      %123 = arith.addi %81, %c5_i32 : i32
      %124 = arith.index_cast %123 : i32 to index
      %125 = memref.load %arg2[%124] : memref<16xi32, #tpu.memory_space<smem>>
      %c5_i32_90 = arith.constant 5 : i32
      %126 = arith.addi %82, %c5_i32_90 : i32
      %c0_i32_91 = arith.constant 0 : i32
      %127 = tpu.memref_slice %arg3[%125, %c0_i32_91] : memref<512x128xf32, #tpu.memory_space<any>> -> memref<1x128xf32, #tpu.memory_space<any>>
      %c0_i32_92 = arith.constant 0 : i32
      %128 = tpu.memref_slice %arg5[%126, %c0_i32_92] : memref<32x128xf32, #tpu.memory_space<vmem>> -> memref<1x128xf32, #tpu.memory_space<vmem>>
      %129 = tpu.memref_slice %arg6[%2] : memref<2x!tpu.dma_semaphore, #tpu.memory_space<semaphore_mem>> -> memref<1x!tpu.dma_semaphore, #tpu.memory_space<semaphore_mem>>
      %130 = tpu.memref_squeeze %129 : memref<1x!tpu.dma_semaphore, #tpu.memory_space<semaphore_mem>> -> memref<!tpu.dma_semaphore, #tpu.memory_space<semaphore_mem>>
      tpu.enqueue_dma source(%127 : memref<1x128xf32, #tpu.memory_space<any>>) target(%128 : memref<1x128xf32, #tpu.memory_space<vmem>>) target_semaphore(%130 : memref<!tpu.dma_semaphore, #tpu.memory_space<semaphore_mem>>)
      %c6_i32 = arith.constant 6 : i32
      %131 = arith.addi %81, %c6_i32 : i32
      %132 = arith.index_cast %131 : i32 to index
      %133 = memref.load %arg2[%132] : memref<16xi32, #tpu.memory_space<smem>>
      %c6_i32_93 = arith.constant 6 : i32
      %134 = arith.addi %82, %c6_i32_93 : i32
      %c0_i32_94 = arith.constant 0 : i32
      %135 = tpu.memref_slice %arg3[%133, %c0_i32_94] : memref<512x128xf32, #tpu.memory_space<any>> -> memref<1x128xf32, #tpu.memory_space<any>>
      %c0_i32_95 = arith.constant 0 : i32
      %136 = tpu.memref_slice %arg5[%134, %c0_i32_95] : memref<32x128xf32, #tpu.memory_space<vmem>> -> memref<1x128xf32, #tpu.memory_space<vmem>>
      %137 = tpu.memref_slice %arg6[%2] : memref<2x!tpu.dma_semaphore, #tpu.memory_space<semaphore_mem>> -> memref<1x!tpu.dma_semaphore, #tpu.memory_space<semaphore_mem>>
      %138 = tpu.memref_squeeze %137 : memref<1x!tpu.dma_semaphore, #tpu.memory_space<semaphore_mem>> -> memref<!tpu.dma_semaphore, #tpu.memory_space<semaphore_mem>>
      tpu.enqueue_dma source(%135 : memref<1x128xf32, #tpu.memory_space<any>>) target(%136 : memref<1x128xf32, #tpu.memory_space<vmem>>) target_semaphore(%138 : memref<!tpu.dma_semaphore, #tpu.memory_space<semaphore_mem>>)
      %c7_i32 = arith.constant 7 : i32
      %139 = arith.addi %81, %c7_i32 : i32
      %140 = arith.index_cast %139 : i32 to index
      %141 = memref.load %arg2[%140] : memref<16xi32, #tpu.memory_space<smem>>
      %c7_i32_96 = arith.constant 7 : i32
      %142 = arith.addi %82, %c7_i32_96 : i32
      %c0_i32_97 = arith.constant 0 : i32
      %143 = tpu.memref_slice %arg3[%141, %c0_i32_97] : memref<512x128xf32, #tpu.memory_space<any>> -> memref<1x128xf32, #tpu.memory_space<any>>
      %c0_i32_98 = arith.constant 0 : i32
      %144 = tpu.memref_slice %arg5[%142, %c0_i32_98] : memref<32x128xf32, #tpu.memory_space<vmem>> -> memref<1x128xf32, #tpu.memory_space<vmem>>
      %145 = tpu.memref_slice %arg6[%2] : memref<2x!tpu.dma_semaphore, #tpu.memory_space<semaphore_mem>> -> memref<1x!tpu.dma_semaphore, #tpu.memory_space<semaphore_mem>>
      %146 = tpu.memref_squeeze %145 : memref<1x!tpu.dma_semaphore, #tpu.memory_space<semaphore_mem>> -> memref<!tpu.dma_semaphore, #tpu.memory_space<semaphore_mem>>
      tpu.enqueue_dma source(%143 : memref<1x128xf32, #tpu.memory_space<any>>) target(%144 : memref<1x128xf32, #tpu.memory_space<vmem>>) target_semaphore(%146 : memref<!tpu.dma_semaphore, #tpu.memory_space<semaphore_mem>>)
      %c8_i32 = arith.constant 8 : i32
      %147 = arith.addi %81, %c8_i32 : i32
      %148 = arith.index_cast %147 : i32 to index
      %149 = memref.load %arg2[%148] : memref<16xi32, #tpu.memory_space<smem>>
      %c8_i32_99 = arith.constant 8 : i32
      %150 = arith.addi %82, %c8_i32_99 : i32
      %c0_i32_100 = arith.constant 0 : i32
      %151 = tpu.memref_slice %arg3[%149, %c0_i32_100] : memref<512x128xf32, #tpu.memory_space<any>> -> memref<1x128xf32, #tpu.memory_space<any>>
      %c0_i32_101 = arith.constant 0 : i32
      %152 = tpu.memref_slice %arg5[%150, %c0_i32_101] : memref<32x128xf32, #tpu.memory_space<vmem>> -> memref<1x128xf32, #tpu.memory_space<vmem>>
      %153 = tpu.memref_slice %arg6[%2] : memref<2x!tpu.dma_semaphore, #tpu.memory_space<semaphore_mem>> -> memref<1x!tpu.dma_semaphore, #tpu.memory_space<semaphore_mem>>
      %154 = tpu.memref_squeeze %153 : memref<1x!tpu.dma_semaphore, #tpu.memory_space<semaphore_mem>> -> memref<!tpu.dma_semaphore, #tpu.memory_space<semaphore_mem>>
      tpu.enqueue_dma source(%151 : memref<1x128xf32, #tpu.memory_space<any>>) target(%152 : memref<1x128xf32, #tpu.memory_space<vmem>>) target_semaphore(%154 : memref<!tpu.dma_semaphore, #tpu.memory_space<semaphore_mem>>)
      %c9_i32 = arith.constant 9 : i32
      %155 = arith.addi %81, %c9_i32 : i32
      %156 = arith.index_cast %155 : i32 to index
      %157 = memref.load %arg2[%156] : memref<16xi32, #tpu.memory_space<smem>>
      %c9_i32_102 = arith.constant 9 : i32
      %158 = arith.addi %82, %c9_i32_102 : i32
      %c0_i32_103 = arith.constant 0 : i32
      %159 = tpu.memref_slice %arg3[%157, %c0_i32_103] : memref<512x128xf32, #tpu.memory_space<any>> -> memref<1x128xf32, #tpu.memory_space<any>>
      %c0_i32_104 = arith.constant 0 : i32
      %160 = tpu.memref_slice %arg5[%158, %c0_i32_104] : memref<32x128xf32, #tpu.memory_space<vmem>> -> memref<1x128xf32, #tpu.memory_space<vmem>>
      %161 = tpu.memref_slice %arg6[%2] : memref<2x!tpu.dma_semaphore, #tpu.memory_space<semaphore_mem>> -> memref<1x!tpu.dma_semaphore, #tpu.memory_space<semaphore_mem>>
      %162 = tpu.memref_squeeze %161 : memref<1x!tpu.dma_semaphore, #tpu.memory_space<semaphore_mem>> -> memref<!tpu.dma_semaphore, #tpu.memory_space<semaphore_mem>>
      tpu.enqueue_dma source(%159 : memref<1x128xf32, #tpu.memory_space<any>>) target(%160 : memref<1x128xf32, #tpu.memory_space<vmem>>) target_semaphore(%162 : memref<!tpu.dma_semaphore, #tpu.memory_space<semaphore_mem>>)
      %c10_i32 = arith.constant 10 : i32
      %163 = arith.addi %81, %c10_i32 : i32
      %164 = arith.index_cast %163 : i32 to index
      %165 = memref.load %arg2[%164] : memref<16xi32, #tpu.memory_space<smem>>
      %c10_i32_105 = arith.constant 10 : i32
      %166 = arith.addi %82, %c10_i32_105 : i32
      %c0_i32_106 = arith.constant 0 : i32
      %167 = tpu.memref_slice %arg3[%165, %c0_i32_106] : memref<512x128xf32, #tpu.memory_space<any>> -> memref<1x128xf32, #tpu.memory_space<any>>
      %c0_i32_107 = arith.constant 0 : i32
      %168 = tpu.memref_slice %arg5[%166, %c0_i32_107] : memref<32x128xf32, #tpu.memory_space<vmem>> -> memref<1x128xf32, #tpu.memory_space<vmem>>
      %169 = tpu.memref_slice %arg6[%2] : memref<2x!tpu.dma_semaphore, #tpu.memory_space<semaphore_mem>> -> memref<1x!tpu.dma_semaphore, #tpu.memory_space<semaphore_mem>>
      %170 = tpu.memref_squeeze %169 : memref<1x!tpu.dma_semaphore, #tpu.memory_space<semaphore_mem>> -> memref<!tpu.dma_semaphore, #tpu.memory_space<semaphore_mem>>
      tpu.enqueue_dma source(%167 : memref<1x128xf32, #tpu.memory_space<any>>) target(%168 : memref<1x128xf32, #tpu.memory_space<vmem>>) target_semaphore(%170 : memref<!tpu.dma_semaphore, #tpu.memory_space<semaphore_mem>>)
      %c11_i32 = arith.constant 11 : i32
      %171 = arith.addi %81, %c11_i32 : i32
      %172 = arith.index_cast %171 : i32 to index
      %173 = memref.load %arg2[%172] : memref<16xi32, #tpu.memory_space<smem>>
      %c11_i32_108 = arith.constant 11 : i32
      %174 = arith.addi %82, %c11_i32_108 : i32
      %c0_i32_109 = arith.constant 0 : i32
      %175 = tpu.memref_slice %arg3[%173, %c0_i32_109] : memref<512x128xf32, #tpu.memory_space<any>> -> memref<1x128xf32, #tpu.memory_space<any>>
      %c0_i32_110 = arith.constant 0 : i32
      %176 = tpu.memref_slice %arg5[%174, %c0_i32_110] : memref<32x128xf32, #tpu.memory_space<vmem>> -> memref<1x128xf32, #tpu.memory_space<vmem>>
      %177 = tpu.memref_slice %arg6[%2] : memref<2x!tpu.dma_semaphore, #tpu.memory_space<semaphore_mem>> -> memref<1x!tpu.dma_semaphore, #tpu.memory_space<semaphore_mem>>
      %178 = tpu.memref_squeeze %177 : memref<1x!tpu.dma_semaphore, #tpu.memory_space<semaphore_mem>> -> memref<!tpu.dma_semaphore, #tpu.memory_space<semaphore_mem>>
      tpu.enqueue_dma source(%175 : memref<1x128xf32, #tpu.memory_space<any>>) target(%176 : memref<1x128xf32, #tpu.memory_space<vmem>>) target_semaphore(%178 : memref<!tpu.dma_semaphore, #tpu.memory_space<semaphore_mem>>)
      %c12_i32 = arith.constant 12 : i32
      %179 = arith.addi %81, %c12_i32 : i32
      %180 = arith.index_cast %179 : i32 to index
      %181 = memref.load %arg2[%180] : memref<16xi32, #tpu.memory_space<smem>>
      %c12_i32_111 = arith.constant 12 : i32
      %182 = arith.addi %82, %c12_i32_111 : i32
      %c0_i32_112 = arith.constant 0 : i32
      %183 = tpu.memref_slice %arg3[%181, %c0_i32_112] : memref<512x128xf32, #tpu.memory_space<any>> -> memref<1x128xf32, #tpu.memory_space<any>>
      %c0_i32_113 = arith.constant 0 : i32
      %184 = tpu.memref_slice %arg5[%182, %c0_i32_113] : memref<32x128xf32, #tpu.memory_space<vmem>> -> memref<1x128xf32, #tpu.memory_space<vmem>>
      %185 = tpu.memref_slice %arg6[%2] : memref<2x!tpu.dma_semaphore, #tpu.memory_space<semaphore_mem>> -> memref<1x!tpu.dma_semaphore, #tpu.memory_space<semaphore_mem>>
      %186 = tpu.memref_squeeze %185 : memref<1x!tpu.dma_semaphore, #tpu.memory_space<semaphore_mem>> -> memref<!tpu.dma_semaphore, #tpu.memory_space<semaphore_mem>>
      tpu.enqueue_dma source(%183 : memref<1x128xf32, #tpu.memory_space<any>>) target(%184 : memref<1x128xf32, #tpu.memory_space<vmem>>) target_semaphore(%186 : memref<!tpu.dma_semaphore, #tpu.memory_space<semaphore_mem>>)
      %c13_i32 = arith.constant 13 : i32
      %187 = arith.addi %81, %c13_i32 : i32
      %188 = arith.index_cast %187 : i32 to index
      %189 = memref.load %arg2[%188] : memref<16xi32, #tpu.memory_space<smem>>
      %c13_i32_114 = arith.constant 13 : i32
      %190 = arith.addi %82, %c13_i32_114 : i32
      %c0_i32_115 = arith.constant 0 : i32
      %191 = tpu.memref_slice %arg3[%189, %c0_i32_115] : memref<512x128xf32, #tpu.memory_space<any>> -> memref<1x128xf32, #tpu.memory_space<any>>
      %c0_i32_116 = arith.constant 0 : i32
      %192 = tpu.memref_slice %arg5[%190, %c0_i32_116] : memref<32x128xf32, #tpu.memory_space<vmem>> -> memref<1x128xf32, #tpu.memory_space<vmem>>
      %193 = tpu.memref_slice %arg6[%2] : memref<2x!tpu.dma_semaphore, #tpu.memory_space<semaphore_mem>> -> memref<1x!tpu.dma_semaphore, #tpu.memory_space<semaphore_mem>>
      %194 = tpu.memref_squeeze %193 : memref<1x!tpu.dma_semaphore, #tpu.memory_space<semaphore_mem>> -> memref<!tpu.dma_semaphore, #tpu.memory_space<semaphore_mem>>
      tpu.enqueue_dma source(%191 : memref<1x128xf32, #tpu.memory_space<any>>) target(%192 : memref<1x128xf32, #tpu.memory_space<vmem>>) target_semaphore(%194 : memref<!tpu.dma_semaphore, #tpu.memory_space<semaphore_mem>>)
      %c14_i32 = arith.constant 14 : i32
      %195 = arith.addi %81, %c14_i32 : i32
      %196 = arith.index_cast %195 : i32 to index
      %197 = memref.load %arg2[%196] : memref<16xi32, #tpu.memory_space<smem>>
      %c14_i32_117 = arith.constant 14 : i32
      %198 = arith.addi %82, %c14_i32_117 : i32
      %c0_i32_118 = arith.constant 0 : i32
      %199 = tpu.memref_slice %arg3[%197, %c0_i32_118] : memref<512x128xf32, #tpu.memory_space<any>> -> memref<1x128xf32, #tpu.memory_space<any>>
      %c0_i32_119 = arith.constant 0 : i32
      %200 = tpu.memref_slice %arg5[%198, %c0_i32_119] : memref<32x128xf32, #tpu.memory_space<vmem>> -> memref<1x128xf32, #tpu.memory_space<vmem>>
      %201 = tpu.memref_slice %arg6[%2] : memref<2x!tpu.dma_semaphore, #tpu.memory_space<semaphore_mem>> -> memref<1x!tpu.dma_semaphore, #tpu.memory_space<semaphore_mem>>
      %202 = tpu.memref_squeeze %201 : memref<1x!tpu.dma_semaphore, #tpu.memory_space<semaphore_mem>> -> memref<!tpu.dma_semaphore, #tpu.memory_space<semaphore_mem>>
      tpu.enqueue_dma source(%199 : memref<1x128xf32, #tpu.memory_space<any>>) target(%200 : memref<1x128xf32, #tpu.memory_space<vmem>>) target_semaphore(%202 : memref<!tpu.dma_semaphore, #tpu.memory_space<semaphore_mem>>)
      %c15_i32 = arith.constant 15 : i32
      %203 = arith.addi %81, %c15_i32 : i32
      %204 = arith.index_cast %203 : i32 to index
      %205 = memref.load %arg2[%204] : memref<16xi32, #tpu.memory_space<smem>>
      %c15_i32_120 = arith.constant 15 : i32
      %206 = arith.addi %82, %c15_i32_120 : i32
      %c0_i32_121 = arith.constant 0 : i32
      %207 = tpu.memref_slice %arg3[%205, %c0_i32_121] : memref<512x128xf32, #tpu.memory_space<any>> -> memref<1x128xf32, #tpu.memory_space<any>>
      %c0_i32_122 = arith.constant 0 : i32
      %208 = tpu.memref_slice %arg5[%206, %c0_i32_122] : memref<32x128xf32, #tpu.memory_space<vmem>> -> memref<1x128xf32, #tpu.memory_space<vmem>>
      %209 = tpu.memref_slice %arg6[%2] : memref<2x!tpu.dma_semaphore, #tpu.memory_space<semaphore_mem>> -> memref<1x!tpu.dma_semaphore, #tpu.memory_space<semaphore_mem>>
      %210 = tpu.memref_squeeze %209 : memref<1x!tpu.dma_semaphore, #tpu.memory_space<semaphore_mem>> -> memref<!tpu.dma_semaphore, #tpu.memory_space<semaphore_mem>>
      tpu.enqueue_dma source(%207 : memref<1x128xf32, #tpu.memory_space<any>>) target(%208 : memref<1x128xf32, #tpu.memory_space<vmem>>) target_semaphore(%210 : memref<!tpu.dma_semaphore, #tpu.memory_space<semaphore_mem>>)
    } else {
    }
    %c1_i32_2 = arith.constant 1 : i32
    %6 = arith.addi %arg1, %c1_i32_2 : i32
    %c1_i32_3 = arith.constant 1 : i32
    %7 = arith.cmpi slt, %6, %c1_i32_3 : i32
    %8 = arith.extui %7 : i1 to i32
    %c0_i32_4 = arith.constant 0 : i32
    %9 = arith.cmpi ne, %8, %c0_i32_4 : i32
    scf.if %9 {
      %c1_i32_71 = arith.constant 1 : i32
      %81 = arith.addi %1, %c1_i32_71 : i32
      %c1_i32_72 = arith.constant 1 : i32
      %82 = arith.subi %c1_i32_72, %2 : i32
      %c16_i32_73 = arith.constant 16 : i32
      %83 = arith.muli %81, %c16_i32_73 : i32
      %c16_i32_74 = arith.constant 16 : i32
      %84 = arith.muli %82, %c16_i32_74 : i32
      %c0_i32_75 = arith.constant 0 : i32
      %85 = arith.addi %83, %c0_i32_75 : i32
      %86 = arith.index_cast %85 : i32 to index
      %87 = memref.load %arg2[%86] : memref<16xi32, #tpu.memory_space<smem>>
      %c0_i32_76 = arith.constant 0 : i32
      %88 = arith.addi %84, %c0_i32_76 : i32
      %c0_i32_77 = arith.constant 0 : i32
      %89 = tpu.memref_slice %arg3[%87, %c0_i32_77] : memref<512x128xf32, #tpu.memory_space<any>> -> memref<1x128xf32, #tpu.memory_space<any>>
      %c0_i32_78 = arith.constant 0 : i32
      %90 = tpu.memref_slice %arg5[%88, %c0_i32_78] : memref<32x128xf32, #tpu.memory_space<vmem>> -> memref<1x128xf32, #tpu.memory_space<vmem>>
      %91 = tpu.memref_slice %arg6[%82] : memref<2x!tpu.dma_semaphore, #tpu.memory_space<semaphore_mem>> -> memref<1x!tpu.dma_semaphore, #tpu.memory_space<semaphore_mem>>
      %92 = tpu.memref_squeeze %91 : memref<1x!tpu.dma_semaphore, #tpu.memory_space<semaphore_mem>> -> memref<!tpu.dma_semaphore, #tpu.memory_space<semaphore_mem>>
      tpu.enqueue_dma source(%89 : memref<1x128xf32, #tpu.memory_space<any>>) target(%90 : memref<1x128xf32, #tpu.memory_space<vmem>>) target_semaphore(%92 : memref<!tpu.dma_semaphore, #tpu.memory_space<semaphore_mem>>)
      %c1_i32_79 = arith.constant 1 : i32
      %93 = arith.addi %83, %c1_i32_79 : i32
      %94 = arith.index_cast %93 : i32 to index
      %95 = memref.load %arg2[%94] : memref<16xi32, #tpu.memory_space<smem>>
      %c1_i32_80 = arith.constant 1 : i32
      %96 = arith.addi %84, %c1_i32_80 : i32
      %c0_i32_81 = arith.constant 0 : i32
      %97 = tpu.memref_slice %arg3[%95, %c0_i32_81] : memref<512x128xf32, #tpu.memory_space<any>> -> memref<1x128xf32, #tpu.memory_space<any>>
      %c0_i32_82 = arith.constant 0 : i32
      %98 = tpu.memref_slice %arg5[%96, %c0_i32_82] : memref<32x128xf32, #tpu.memory_space<vmem>> -> memref<1x128xf32, #tpu.memory_space<vmem>>
      %99 = tpu.memref_slice %arg6[%82] : memref<2x!tpu.dma_semaphore, #tpu.memory_space<semaphore_mem>> -> memref<1x!tpu.dma_semaphore, #tpu.memory_space<semaphore_mem>>
      %100 = tpu.memref_squeeze %99 : memref<1x!tpu.dma_semaphore, #tpu.memory_space<semaphore_mem>> -> memref<!tpu.dma_semaphore, #tpu.memory_space<semaphore_mem>>
      tpu.enqueue_dma source(%97 : memref<1x128xf32, #tpu.memory_space<any>>) target(%98 : memref<1x128xf32, #tpu.memory_space<vmem>>) target_semaphore(%100 : memref<!tpu.dma_semaphore, #tpu.memory_space<semaphore_mem>>)
      %c2_i32 = arith.constant 2 : i32
      %101 = arith.addi %83, %c2_i32 : i32
      %102 = arith.index_cast %101 : i32 to index
      %103 = memref.load %arg2[%102] : memref<16xi32, #tpu.memory_space<smem>>
      %c2_i32_83 = arith.constant 2 : i32
      %104 = arith.addi %84, %c2_i32_83 : i32
      %c0_i32_84 = arith.constant 0 : i32
      %105 = tpu.memref_slice %arg3[%103, %c0_i32_84] : memref<512x128xf32, #tpu.memory_space<any>> -> memref<1x128xf32, #tpu.memory_space<any>>
      %c0_i32_85 = arith.constant 0 : i32
      %106 = tpu.memref_slice %arg5[%104, %c0_i32_85] : memref<32x128xf32, #tpu.memory_space<vmem>> -> memref<1x128xf32, #tpu.memory_space<vmem>>
      %107 = tpu.memref_slice %arg6[%82] : memref<2x!tpu.dma_semaphore, #tpu.memory_space<semaphore_mem>> -> memref<1x!tpu.dma_semaphore, #tpu.memory_space<semaphore_mem>>
      %108 = tpu.memref_squeeze %107 : memref<1x!tpu.dma_semaphore, #tpu.memory_space<semaphore_mem>> -> memref<!tpu.dma_semaphore, #tpu.memory_space<semaphore_mem>>
      tpu.enqueue_dma source(%105 : memref<1x128xf32, #tpu.memory_space<any>>) target(%106 : memref<1x128xf32, #tpu.memory_space<vmem>>) target_semaphore(%108 : memref<!tpu.dma_semaphore, #tpu.memory_space<semaphore_mem>>)
      %c3_i32 = arith.constant 3 : i32
      %109 = arith.addi %83, %c3_i32 : i32
      %110 = arith.index_cast %109 : i32 to index
      %111 = memref.load %arg2[%110] : memref<16xi32, #tpu.memory_space<smem>>
      %c3_i32_86 = arith.constant 3 : i32
      %112 = arith.addi %84, %c3_i32_86 : i32
      %c0_i32_87 = arith.constant 0 : i32
      %113 = tpu.memref_slice %arg3[%111, %c0_i32_87] : memref<512x128xf32, #tpu.memory_space<any>> -> memref<1x128xf32, #tpu.memory_space<any>>
      %c0_i32_88 = arith.constant 0 : i32
      %114 = tpu.memref_slice %arg5[%112, %c0_i32_88] : memref<32x128xf32, #tpu.memory_space<vmem>> -> memref<1x128xf32, #tpu.memory_space<vmem>>
      %115 = tpu.memref_slice %arg6[%82] : memref<2x!tpu.dma_semaphore, #tpu.memory_space<semaphore_mem>> -> memref<1x!tpu.dma_semaphore, #tpu.memory_space<semaphore_mem>>
      %116 = tpu.memref_squeeze %115 : memref<1x!tpu.dma_semaphore, #tpu.memory_space<semaphore_mem>> -> memref<!tpu.dma_semaphore, #tpu.memory_space<semaphore_mem>>
      tpu.enqueue_dma source(%113 : memref<1x128xf32, #tpu.memory_space<any>>) target(%114 : memref<1x128xf32, #tpu.memory_space<vmem>>) target_semaphore(%116 : memref<!tpu.dma_semaphore, #tpu.memory_space<semaphore_mem>>)
      %c4_i32 = arith.constant 4 : i32
      %117 = arith.addi %83, %c4_i32 : i32
      %118 = arith.index_cast %117 : i32 to index
      %119 = memref.load %arg2[%118] : memref<16xi32, #tpu.memory_space<smem>>
      %c4_i32_89 = arith.constant 4 : i32
      %120 = arith.addi %84, %c4_i32_89 : i32
      %c0_i32_90 = arith.constant 0 : i32
      %121 = tpu.memref_slice %arg3[%119, %c0_i32_90] : memref<512x128xf32, #tpu.memory_space<any>> -> memref<1x128xf32, #tpu.memory_space<any>>
      %c0_i32_91 = arith.constant 0 : i32
      %122 = tpu.memref_slice %arg5[%120, %c0_i32_91] : memref<32x128xf32, #tpu.memory_space<vmem>> -> memref<1x128xf32, #tpu.memory_space<vmem>>
      %123 = tpu.memref_slice %arg6[%82] : memref<2x!tpu.dma_semaphore, #tpu.memory_space<semaphore_mem>> -> memref<1x!tpu.dma_semaphore, #tpu.memory_space<semaphore_mem>>
      %124 = tpu.memref_squeeze %123 : memref<1x!tpu.dma_semaphore, #tpu.memory_space<semaphore_mem>> -> memref<!tpu.dma_semaphore, #tpu.memory_space<semaphore_mem>>
      tpu.enqueue_dma source(%121 : memref<1x128xf32, #tpu.memory_space<any>>) target(%122 : memref<1x128xf32, #tpu.memory_space<vmem>>) target_semaphore(%124 : memref<!tpu.dma_semaphore, #tpu.memory_space<semaphore_mem>>)
      %c5_i32 = arith.constant 5 : i32
      %125 = arith.addi %83, %c5_i32 : i32
      %126 = arith.index_cast %125 : i32 to index
      %127 = memref.load %arg2[%126] : memref<16xi32, #tpu.memory_space<smem>>
      %c5_i32_92 = arith.constant 5 : i32
      %128 = arith.addi %84, %c5_i32_92 : i32
      %c0_i32_93 = arith.constant 0 : i32
      %129 = tpu.memref_slice %arg3[%127, %c0_i32_93] : memref<512x128xf32, #tpu.memory_space<any>> -> memref<1x128xf32, #tpu.memory_space<any>>
      %c0_i32_94 = arith.constant 0 : i32
      %130 = tpu.memref_slice %arg5[%128, %c0_i32_94] : memref<32x128xf32, #tpu.memory_space<vmem>> -> memref<1x128xf32, #tpu.memory_space<vmem>>
      %131 = tpu.memref_slice %arg6[%82] : memref<2x!tpu.dma_semaphore, #tpu.memory_space<semaphore_mem>> -> memref<1x!tpu.dma_semaphore, #tpu.memory_space<semaphore_mem>>
      %132 = tpu.memref_squeeze %131 : memref<1x!tpu.dma_semaphore, #tpu.memory_space<semaphore_mem>> -> memref<!tpu.dma_semaphore, #tpu.memory_space<semaphore_mem>>
      tpu.enqueue_dma source(%129 : memref<1x128xf32, #tpu.memory_space<any>>) target(%130 : memref<1x128xf32, #tpu.memory_space<vmem>>) target_semaphore(%132 : memref<!tpu.dma_semaphore, #tpu.memory_space<semaphore_mem>>)
      %c6_i32 = arith.constant 6 : i32
      %133 = arith.addi %83, %c6_i32 : i32
      %134 = arith.index_cast %133 : i32 to index
      %135 = memref.load %arg2[%134] : memref<16xi32, #tpu.memory_space<smem>>
      %c6_i32_95 = arith.constant 6 : i32
      %136 = arith.addi %84, %c6_i32_95 : i32
      %c0_i32_96 = arith.constant 0 : i32
      %137 = tpu.memref_slice %arg3[%135, %c0_i32_96] : memref<512x128xf32, #tpu.memory_space<any>> -> memref<1x128xf32, #tpu.memory_space<any>>
      %c0_i32_97 = arith.constant 0 : i32
      %138 = tpu.memref_slice %arg5[%136, %c0_i32_97] : memref<32x128xf32, #tpu.memory_space<vmem>> -> memref<1x128xf32, #tpu.memory_space<vmem>>
      %139 = tpu.memref_slice %arg6[%82] : memref<2x!tpu.dma_semaphore, #tpu.memory_space<semaphore_mem>> -> memref<1x!tpu.dma_semaphore, #tpu.memory_space<semaphore_mem>>
      %140 = tpu.memref_squeeze %139 : memref<1x!tpu.dma_semaphore, #tpu.memory_space<semaphore_mem>> -> memref<!tpu.dma_semaphore, #tpu.memory_space<semaphore_mem>>
      tpu.enqueue_dma source(%137 : memref<1x128xf32, #tpu.memory_space<any>>) target(%138 : memref<1x128xf32, #tpu.memory_space<vmem>>) target_semaphore(%140 : memref<!tpu.dma_semaphore, #tpu.memory_space<semaphore_mem>>)
      %c7_i32 = arith.constant 7 : i32
      %141 = arith.addi %83, %c7_i32 : i32
      %142 = arith.index_cast %141 : i32 to index
      %143 = memref.load %arg2[%142] : memref<16xi32, #tpu.memory_space<smem>>
      %c7_i32_98 = arith.constant 7 : i32
      %144 = arith.addi %84, %c7_i32_98 : i32
      %c0_i32_99 = arith.constant 0 : i32
      %145 = tpu.memref_slice %arg3[%143, %c0_i32_99] : memref<512x128xf32, #tpu.memory_space<any>> -> memref<1x128xf32, #tpu.memory_space<any>>
      %c0_i32_100 = arith.constant 0 : i32
      %146 = tpu.memref_slice %arg5[%144, %c0_i32_100] : memref<32x128xf32, #tpu.memory_space<vmem>> -> memref<1x128xf32, #tpu.memory_space<vmem>>
      %147 = tpu.memref_slice %arg6[%82] : memref<2x!tpu.dma_semaphore, #tpu.memory_space<semaphore_mem>> -> memref<1x!tpu.dma_semaphore, #tpu.memory_space<semaphore_mem>>
      %148 = tpu.memref_squeeze %147 : memref<1x!tpu.dma_semaphore, #tpu.memory_space<semaphore_mem>> -> memref<!tpu.dma_semaphore, #tpu.memory_space<semaphore_mem>>
      tpu.enqueue_dma source(%145 : memref<1x128xf32, #tpu.memory_space<any>>) target(%146 : memref<1x128xf32, #tpu.memory_space<vmem>>) target_semaphore(%148 : memref<!tpu.dma_semaphore, #tpu.memory_space<semaphore_mem>>)
      %c8_i32 = arith.constant 8 : i32
      %149 = arith.addi %83, %c8_i32 : i32
      %150 = arith.index_cast %149 : i32 to index
      %151 = memref.load %arg2[%150] : memref<16xi32, #tpu.memory_space<smem>>
      %c8_i32_101 = arith.constant 8 : i32
      %152 = arith.addi %84, %c8_i32_101 : i32
      %c0_i32_102 = arith.constant 0 : i32
      %153 = tpu.memref_slice %arg3[%151, %c0_i32_102] : memref<512x128xf32, #tpu.memory_space<any>> -> memref<1x128xf32, #tpu.memory_space<any>>
      %c0_i32_103 = arith.constant 0 : i32
      %154 = tpu.memref_slice %arg5[%152, %c0_i32_103] : memref<32x128xf32, #tpu.memory_space<vmem>> -> memref<1x128xf32, #tpu.memory_space<vmem>>
      %155 = tpu.memref_slice %arg6[%82] : memref<2x!tpu.dma_semaphore, #tpu.memory_space<semaphore_mem>> -> memref<1x!tpu.dma_semaphore, #tpu.memory_space<semaphore_mem>>
      %156 = tpu.memref_squeeze %155 : memref<1x!tpu.dma_semaphore, #tpu.memory_space<semaphore_mem>> -> memref<!tpu.dma_semaphore, #tpu.memory_space<semaphore_mem>>
      tpu.enqueue_dma source(%153 : memref<1x128xf32, #tpu.memory_space<any>>) target(%154 : memref<1x128xf32, #tpu.memory_space<vmem>>) target_semaphore(%156 : memref<!tpu.dma_semaphore, #tpu.memory_space<semaphore_mem>>)
      %c9_i32 = arith.constant 9 : i32
      %157 = arith.addi %83, %c9_i32 : i32
      %158 = arith.index_cast %157 : i32 to index
      %159 = memref.load %arg2[%158] : memref<16xi32, #tpu.memory_space<smem>>
      %c9_i32_104 = arith.constant 9 : i32
      %160 = arith.addi %84, %c9_i32_104 : i32
      %c0_i32_105 = arith.constant 0 : i32
      %161 = tpu.memref_slice %arg3[%159, %c0_i32_105] : memref<512x128xf32, #tpu.memory_space<any>> -> memref<1x128xf32, #tpu.memory_space<any>>
      %c0_i32_106 = arith.constant 0 : i32
      %162 = tpu.memref_slice %arg5[%160, %c0_i32_106] : memref<32x128xf32, #tpu.memory_space<vmem>> -> memref<1x128xf32, #tpu.memory_space<vmem>>
      %163 = tpu.memref_slice %arg6[%82] : memref<2x!tpu.dma_semaphore, #tpu.memory_space<semaphore_mem>> -> memref<1x!tpu.dma_semaphore, #tpu.memory_space<semaphore_mem>>
      %164 = tpu.memref_squeeze %163 : memref<1x!tpu.dma_semaphore, #tpu.memory_space<semaphore_mem>> -> memref<!tpu.dma_semaphore, #tpu.memory_space<semaphore_mem>>
      tpu.enqueue_dma source(%161 : memref<1x128xf32, #tpu.memory_space<any>>) target(%162 : memref<1x128xf32, #tpu.memory_space<vmem>>) target_semaphore(%164 : memref<!tpu.dma_semaphore, #tpu.memory_space<semaphore_mem>>)
      %c10_i32 = arith.constant 10 : i32
      %165 = arith.addi %83, %c10_i32 : i32
      %166 = arith.index_cast %165 : i32 to index
      %167 = memref.load %arg2[%166] : memref<16xi32, #tpu.memory_space<smem>>
      %c10_i32_107 = arith.constant 10 : i32
      %168 = arith.addi %84, %c10_i32_107 : i32
      %c0_i32_108 = arith.constant 0 : i32
      %169 = tpu.memref_slice %arg3[%167, %c0_i32_108] : memref<512x128xf32, #tpu.memory_space<any>> -> memref<1x128xf32, #tpu.memory_space<any>>
      %c0_i32_109 = arith.constant 0 : i32
      %170 = tpu.memref_slice %arg5[%168, %c0_i32_109] : memref<32x128xf32, #tpu.memory_space<vmem>> -> memref<1x128xf32, #tpu.memory_space<vmem>>
      %171 = tpu.memref_slice %arg6[%82] : memref<2x!tpu.dma_semaphore, #tpu.memory_space<semaphore_mem>> -> memref<1x!tpu.dma_semaphore, #tpu.memory_space<semaphore_mem>>
      %172 = tpu.memref_squeeze %171 : memref<1x!tpu.dma_semaphore, #tpu.memory_space<semaphore_mem>> -> memref<!tpu.dma_semaphore, #tpu.memory_space<semaphore_mem>>
      tpu.enqueue_dma source(%169 : memref<1x128xf32, #tpu.memory_space<any>>) target(%170 : memref<1x128xf32, #tpu.memory_space<vmem>>) target_semaphore(%172 : memref<!tpu.dma_semaphore, #tpu.memory_space<semaphore_mem>>)
      %c11_i32 = arith.constant 11 : i32
      %173 = arith.addi %83, %c11_i32 : i32
      %174 = arith.index_cast %173 : i32 to index
      %175 = memref.load %arg2[%174] : memref<16xi32, #tpu.memory_space<smem>>
      %c11_i32_110 = arith.constant 11 : i32
      %176 = arith.addi %84, %c11_i32_110 : i32
      %c0_i32_111 = arith.constant 0 : i32
      %177 = tpu.memref_slice %arg3[%175, %c0_i32_111] : memref<512x128xf32, #tpu.memory_space<any>> -> memref<1x128xf32, #tpu.memory_space<any>>
      %c0_i32_112 = arith.constant 0 : i32
      %178 = tpu.memref_slice %arg5[%176, %c0_i32_112] : memref<32x128xf32, #tpu.memory_space<vmem>> -> memref<1x128xf32, #tpu.memory_space<vmem>>
      %179 = tpu.memref_slice %arg6[%82] : memref<2x!tpu.dma_semaphore, #tpu.memory_space<semaphore_mem>> -> memref<1x!tpu.dma_semaphore, #tpu.memory_space<semaphore_mem>>
      %180 = tpu.memref_squeeze %179 : memref<1x!tpu.dma_semaphore, #tpu.memory_space<semaphore_mem>> -> memref<!tpu.dma_semaphore, #tpu.memory_space<semaphore_mem>>
      tpu.enqueue_dma source(%177 : memref<1x128xf32, #tpu.memory_space<any>>) target(%178 : memref<1x128xf32, #tpu.memory_space<vmem>>) target_semaphore(%180 : memref<!tpu.dma_semaphore, #tpu.memory_space<semaphore_mem>>)
      %c12_i32 = arith.constant 12 : i32
      %181 = arith.addi %83, %c12_i32 : i32
      %182 = arith.index_cast %181 : i32 to index
      %183 = memref.load %arg2[%182] : memref<16xi32, #tpu.memory_space<smem>>
      %c12_i32_113 = arith.constant 12 : i32
      %184 = arith.addi %84, %c12_i32_113 : i32
      %c0_i32_114 = arith.constant 0 : i32
      %185 = tpu.memref_slice %arg3[%183, %c0_i32_114] : memref<512x128xf32, #tpu.memory_space<any>> -> memref<1x128xf32, #tpu.memory_space<any>>
      %c0_i32_115 = arith.constant 0 : i32
      %186 = tpu.memref_slice %arg5[%184, %c0_i32_115] : memref<32x128xf32, #tpu.memory_space<vmem>> -> memref<1x128xf32, #tpu.memory_space<vmem>>
      %187 = tpu.memref_slice %arg6[%82] : memref<2x!tpu.dma_semaphore, #tpu.memory_space<semaphore_mem>> -> memref<1x!tpu.dma_semaphore, #tpu.memory_space<semaphore_mem>>
      %188 = tpu.memref_squeeze %187 : memref<1x!tpu.dma_semaphore, #tpu.memory_space<semaphore_mem>> -> memref<!tpu.dma_semaphore, #tpu.memory_space<semaphore_mem>>
      tpu.enqueue_dma source(%185 : memref<1x128xf32, #tpu.memory_space<any>>) target(%186 : memref<1x128xf32, #tpu.memory_space<vmem>>) target_semaphore(%188 : memref<!tpu.dma_semaphore, #tpu.memory_space<semaphore_mem>>)
      %c13_i32 = arith.constant 13 : i32
      %189 = arith.addi %83, %c13_i32 : i32
      %190 = arith.index_cast %189 : i32 to index
      %191 = memref.load %arg2[%190] : memref<16xi32, #tpu.memory_space<smem>>
      %c13_i32_116 = arith.constant 13 : i32
      %192 = arith.addi %84, %c13_i32_116 : i32
      %c0_i32_117 = arith.constant 0 : i32
      %193 = tpu.memref_slice %arg3[%191, %c0_i32_117] : memref<512x128xf32, #tpu.memory_space<any>> -> memref<1x128xf32, #tpu.memory_space<any>>
      %c0_i32_118 = arith.constant 0 : i32
      %194 = tpu.memref_slice %arg5[%192, %c0_i32_118] : memref<32x128xf32, #tpu.memory_space<vmem>> -> memref<1x128xf32, #tpu.memory_space<vmem>>
      %195 = tpu.memref_slice %arg6[%82] : memref<2x!tpu.dma_semaphore, #tpu.memory_space<semaphore_mem>> -> memref<1x!tpu.dma_semaphore, #tpu.memory_space<semaphore_mem>>
      %196 = tpu.memref_squeeze %195 : memref<1x!tpu.dma_semaphore, #tpu.memory_space<semaphore_mem>> -> memref<!tpu.dma_semaphore, #tpu.memory_space<semaphore_mem>>
      tpu.enqueue_dma source(%193 : memref<1x128xf32, #tpu.memory_space<any>>) target(%194 : memref<1x128xf32, #tpu.memory_space<vmem>>) target_semaphore(%196 : memref<!tpu.dma_semaphore, #tpu.memory_space<semaphore_mem>>)
      %c14_i32 = arith.constant 14 : i32
      %197 = arith.addi %83, %c14_i32 : i32
      %198 = arith.index_cast %197 : i32 to index
      %199 = memref.load %arg2[%198] : memref<16xi32, #tpu.memory_space<smem>>
      %c14_i32_119 = arith.constant 14 : i32
      %200 = arith.addi %84, %c14_i32_119 : i32
      %c0_i32_120 = arith.constant 0 : i32
      %201 = tpu.memref_slice %arg3[%199, %c0_i32_120] : memref<512x128xf32, #tpu.memory_space<any>> -> memref<1x128xf32, #tpu.memory_space<any>>
      %c0_i32_121 = arith.constant 0 : i32
      %202 = tpu.memref_slice %arg5[%200, %c0_i32_121] : memref<32x128xf32, #tpu.memory_space<vmem>> -> memref<1x128xf32, #tpu.memory_space<vmem>>
      %203 = tpu.memref_slice %arg6[%82] : memref<2x!tpu.dma_semaphore, #tpu.memory_space<semaphore_mem>> -> memref<1x!tpu.dma_semaphore, #tpu.memory_space<semaphore_mem>>
      %204 = tpu.memref_squeeze %203 : memref<1x!tpu.dma_semaphore, #tpu.memory_space<semaphore_mem>> -> memref<!tpu.dma_semaphore, #tpu.memory_space<semaphore_mem>>
      tpu.enqueue_dma source(%201 : memref<1x128xf32, #tpu.memory_space<any>>) target(%202 : memref<1x128xf32, #tpu.memory_space<vmem>>) target_semaphore(%204 : memref<!tpu.dma_semaphore, #tpu.memory_space<semaphore_mem>>)
      %c15_i32 = arith.constant 15 : i32
      %205 = arith.addi %83, %c15_i32 : i32
      %206 = arith.index_cast %205 : i32 to index
      %207 = memref.load %arg2[%206] : memref<16xi32, #tpu.memory_space<smem>>
      %c15_i32_122 = arith.constant 15 : i32
      %208 = arith.addi %84, %c15_i32_122 : i32
      %c0_i32_123 = arith.constant 0 : i32
      %209 = tpu.memref_slice %arg3[%207, %c0_i32_123] : memref<512x128xf32, #tpu.memory_space<any>> -> memref<1x128xf32, #tpu.memory_space<any>>
      %c0_i32_124 = arith.constant 0 : i32
      %210 = tpu.memref_slice %arg5[%208, %c0_i32_124] : memref<32x128xf32, #tpu.memory_space<vmem>> -> memref<1x128xf32, #tpu.memory_space<vmem>>
      %211 = tpu.memref_slice %arg6[%82] : memref<2x!tpu.dma_semaphore, #tpu.memory_space<semaphore_mem>> -> memref<1x!tpu.dma_semaphore, #tpu.memory_space<semaphore_mem>>
      %212 = tpu.memref_squeeze %211 : memref<1x!tpu.dma_semaphore, #tpu.memory_space<semaphore_mem>> -> memref<!tpu.dma_semaphore, #tpu.memory_space<semaphore_mem>>
      tpu.enqueue_dma source(%209 : memref<1x128xf32, #tpu.memory_space<any>>) target(%210 : memref<1x128xf32, #tpu.memory_space<vmem>>) target_semaphore(%212 : memref<!tpu.dma_semaphore, #tpu.memory_space<semaphore_mem>>)
    } else {
    }
    %c0_i32_5 = arith.constant 0 : i32
    %c0_i32_6 = arith.constant 0 : i32
    %10 = tpu.memref_slice %arg3[%c0_i32_5, %c0_i32_6] : memref<512x128xf32, #tpu.memory_space<any>> -> memref<1x128xf32, #tpu.memory_space<any>>
    %c0_i32_7 = arith.constant 0 : i32
    %c0_i32_8 = arith.constant 0 : i32
    %11 = tpu.memref_slice %arg5[%c0_i32_7, %c0_i32_8] : memref<32x128xf32, #tpu.memory_space<vmem>> -> memref<1x128xf32, #tpu.memory_space<vmem>>
    %12 = tpu.memref_slice %arg6[%2] : memref<2x!tpu.dma_semaphore, #tpu.memory_space<semaphore_mem>> -> memref<1x!tpu.dma_semaphore, #tpu.memory_space<semaphore_mem>>
    %13 = tpu.memref_squeeze %12 : memref<1x!tpu.dma_semaphore, #tpu.memory_space<semaphore_mem>> -> memref<!tpu.dma_semaphore, #tpu.memory_space<semaphore_mem>>
    tpu.wait_dma2 semaphore(%13 : memref<!tpu.dma_semaphore, #tpu.memory_space<semaphore_mem>>) src(%10 : memref<1x128xf32, #tpu.memory_space<any>>) dst(%11 : memref<1x128xf32, #tpu.memory_space<vmem>>)
    %c0_i32_9 = arith.constant 0 : i32
    %c0_i32_10 = arith.constant 0 : i32
    %14 = tpu.memref_slice %arg3[%c0_i32_9, %c0_i32_10] : memref<512x128xf32, #tpu.memory_space<any>> -> memref<1x128xf32, #tpu.memory_space<any>>
    %c0_i32_11 = arith.constant 0 : i32
    %c0_i32_12 = arith.constant 0 : i32
    %15 = tpu.memref_slice %arg5[%c0_i32_11, %c0_i32_12] : memref<32x128xf32, #tpu.memory_space<vmem>> -> memref<1x128xf32, #tpu.memory_space<vmem>>
    %16 = tpu.memref_slice %arg6[%2] : memref<2x!tpu.dma_semaphore, #tpu.memory_space<semaphore_mem>> -> memref<1x!tpu.dma_semaphore, #tpu.memory_space<semaphore_mem>>
    %17 = tpu.memref_squeeze %16 : memref<1x!tpu.dma_semaphore, #tpu.memory_space<semaphore_mem>> -> memref<!tpu.dma_semaphore, #tpu.memory_space<semaphore_mem>>
    tpu.wait_dma2 semaphore(%17 : memref<!tpu.dma_semaphore, #tpu.memory_space<semaphore_mem>>) src(%14 : memref<1x128xf32, #tpu.memory_space<any>>) dst(%15 : memref<1x128xf32, #tpu.memory_space<vmem>>)
    %c0_i32_13 = arith.constant 0 : i32
    %c0_i32_14 = arith.constant 0 : i32
    %18 = tpu.memref_slice %arg3[%c0_i32_13, %c0_i32_14] : memref<512x128xf32, #tpu.memory_space<any>> -> memref<1x128xf32, #tpu.memory_space<any>>
    %c0_i32_15 = arith.constant 0 : i32
    %c0_i32_16 = arith.constant 0 : i32
    %19 = tpu.memref_slice %arg5[%c0_i32_15, %c0_i32_16] : memref<32x128xf32, #tpu.memory_space<vmem>> -> memref<1x128xf32, #tpu.memory_space<vmem>>
    %20 = tpu.memref_slice %arg6[%2] : memref<2x!tpu.dma_semaphore, #tpu.memory_space<semaphore_mem>> -> memref<1x!tpu.dma_semaphore, #tpu.memory_space<semaphore_mem>>
    %21 = tpu.memref_squeeze %20 : memref<1x!tpu.dma_semaphore, #tpu.memory_space<semaphore_mem>> -> memref<!tpu.dma_semaphore, #tpu.memory_space<semaphore_mem>>
    tpu.wait_dma2 semaphore(%21 : memref<!tpu.dma_semaphore, #tpu.memory_space<semaphore_mem>>) src(%18 : memref<1x128xf32, #tpu.memory_space<any>>) dst(%19 : memref<1x128xf32, #tpu.memory_space<vmem>>)
    %c0_i32_17 = arith.constant 0 : i32
    %c0_i32_18 = arith.constant 0 : i32
    %22 = tpu.memref_slice %arg3[%c0_i32_17, %c0_i32_18] : memref<512x128xf32, #tpu.memory_space<any>> -> memref<1x128xf32, #tpu.memory_space<any>>
    %c0_i32_19 = arith.constant 0 : i32
    %c0_i32_20 = arith.constant 0 : i32
    %23 = tpu.memref_slice %arg5[%c0_i32_19, %c0_i32_20] : memref<32x128xf32, #tpu.memory_space<vmem>> -> memref<1x128xf32, #tpu.memory_space<vmem>>
    %24 = tpu.memref_slice %arg6[%2] : memref<2x!tpu.dma_semaphore, #tpu.memory_space<semaphore_mem>> -> memref<1x!tpu.dma_semaphore, #tpu.memory_space<semaphore_mem>>
    %25 = tpu.memref_squeeze %24 : memref<1x!tpu.dma_semaphore, #tpu.memory_space<semaphore_mem>> -> memref<!tpu.dma_semaphore, #tpu.memory_space<semaphore_mem>>
    tpu.wait_dma2 semaphore(%25 : memref<!tpu.dma_semaphore, #tpu.memory_space<semaphore_mem>>) src(%22 : memref<1x128xf32, #tpu.memory_space<any>>) dst(%23 : memref<1x128xf32, #tpu.memory_space<vmem>>)
    %c0_i32_21 = arith.constant 0 : i32
    %c0_i32_22 = arith.constant 0 : i32
    %26 = tpu.memref_slice %arg3[%c0_i32_21, %c0_i32_22] : memref<512x128xf32, #tpu.memory_space<any>> -> memref<1x128xf32, #tpu.memory_space<any>>
    %c0_i32_23 = arith.constant 0 : i32
    %c0_i32_24 = arith.constant 0 : i32
    %27 = tpu.memref_slice %arg5[%c0_i32_23, %c0_i32_24] : memref<32x128xf32, #tpu.memory_space<vmem>> -> memref<1x128xf32, #tpu.memory_space<vmem>>
    %28 = tpu.memref_slice %arg6[%2] : memref<2x!tpu.dma_semaphore, #tpu.memory_space<semaphore_mem>> -> memref<1x!tpu.dma_semaphore, #tpu.memory_space<semaphore_mem>>
    %29 = tpu.memref_squeeze %28 : memref<1x!tpu.dma_semaphore, #tpu.memory_space<semaphore_mem>> -> memref<!tpu.dma_semaphore, #tpu.memory_space<semaphore_mem>>
    tpu.wait_dma2 semaphore(%29 : memref<!tpu.dma_semaphore, #tpu.memory_space<semaphore_mem>>) src(%26 : memref<1x128xf32, #tpu.memory_space<any>>) dst(%27 : memref<1x128xf32, #tpu.memory_space<vmem>>)
    %c0_i32_25 = arith.constant 0 : i32
    %c0_i32_26 = arith.constant 0 : i32
    %30 = tpu.memref_slice %arg3[%c0_i32_25, %c0_i32_26] : memref<512x128xf32, #tpu.memory_space<any>> -> memref<1x128xf32, #tpu.memory_space<any>>
    %c0_i32_27 = arith.constant 0 : i32
    %c0_i32_28 = arith.constant 0 : i32
    %31 = tpu.memref_slice %arg5[%c0_i32_27, %c0_i32_28] : memref<32x128xf32, #tpu.memory_space<vmem>> -> memref<1x128xf32, #tpu.memory_space<vmem>>
    %32 = tpu.memref_slice %arg6[%2] : memref<2x!tpu.dma_semaphore, #tpu.memory_space<semaphore_mem>> -> memref<1x!tpu.dma_semaphore, #tpu.memory_space<semaphore_mem>>
    %33 = tpu.memref_squeeze %32 : memref<1x!tpu.dma_semaphore, #tpu.memory_space<semaphore_mem>> -> memref<!tpu.dma_semaphore, #tpu.memory_space<semaphore_mem>>
    tpu.wait_dma2 semaphore(%33 : memref<!tpu.dma_semaphore, #tpu.memory_space<semaphore_mem>>) src(%30 : memref<1x128xf32, #tpu.memory_space<any>>) dst(%31 : memref<1x128xf32, #tpu.memory_space<vmem>>)
    %c0_i32_29 = arith.constant 0 : i32
    %c0_i32_30 = arith.constant 0 : i32
    %34 = tpu.memref_slice %arg3[%c0_i32_29, %c0_i32_30] : memref<512x128xf32, #tpu.memory_space<any>> -> memref<1x128xf32, #tpu.memory_space<any>>
    %c0_i32_31 = arith.constant 0 : i32
    %c0_i32_32 = arith.constant 0 : i32
    %35 = tpu.memref_slice %arg5[%c0_i32_31, %c0_i32_32] : memref<32x128xf32, #tpu.memory_space<vmem>> -> memref<1x128xf32, #tpu.memory_space<vmem>>
    %36 = tpu.memref_slice %arg6[%2] : memref<2x!tpu.dma_semaphore, #tpu.memory_space<semaphore_mem>> -> memref<1x!tpu.dma_semaphore, #tpu.memory_space<semaphore_mem>>
    %37 = tpu.memref_squeeze %36 : memref<1x!tpu.dma_semaphore, #tpu.memory_space<semaphore_mem>> -> memref<!tpu.dma_semaphore, #tpu.memory_space<semaphore_mem>>
    tpu.wait_dma2 semaphore(%37 : memref<!tpu.dma_semaphore, #tpu.memory_space<semaphore_mem>>) src(%34 : memref<1x128xf32, #tpu.memory_space<any>>) dst(%35 : memref<1x128xf32, #tpu.memory_space<vmem>>)
    %c0_i32_33 = arith.constant 0 : i32
    %c0_i32_34 = arith.constant 0 : i32
    %38 = tpu.memref_slice %arg3[%c0_i32_33, %c0_i32_34] : memref<512x128xf32, #tpu.memory_space<any>> -> memref<1x128xf32, #tpu.memory_space<any>>
    %c0_i32_35 = arith.constant 0 : i32
    %c0_i32_36 = arith.constant 0 : i32
    %39 = tpu.memref_slice %arg5[%c0_i32_35, %c0_i32_36] : memref<32x128xf32, #tpu.memory_space<vmem>> -> memref<1x128xf32, #tpu.memory_space<vmem>>
    %40 = tpu.memref_slice %arg6[%2] : memref<2x!tpu.dma_semaphore, #tpu.memory_space<semaphore_mem>> -> memref<1x!tpu.dma_semaphore, #tpu.memory_space<semaphore_mem>>
    %41 = tpu.memref_squeeze %40 : memref<1x!tpu.dma_semaphore, #tpu.memory_space<semaphore_mem>> -> memref<!tpu.dma_semaphore, #tpu.memory_space<semaphore_mem>>
    tpu.wait_dma2 semaphore(%41 : memref<!tpu.dma_semaphore, #tpu.memory_space<semaphore_mem>>) src(%38 : memref<1x128xf32, #tpu.memory_space<any>>) dst(%39 : memref<1x128xf32, #tpu.memory_space<vmem>>)
    %c0_i32_37 = arith.constant 0 : i32
    %c0_i32_38 = arith.constant 0 : i32
    %42 = tpu.memref_slice %arg3[%c0_i32_37, %c0_i32_38] : memref<512x128xf32, #tpu.memory_space<any>> -> memref<1x128xf32, #tpu.memory_space<any>>
    %c0_i32_39 = arith.constant 0 : i32
    %c0_i32_40 = arith.constant 0 : i32
    %43 = tpu.memref_slice %arg5[%c0_i32_39, %c0_i32_40] : memref<32x128xf32, #tpu.memory_space<vmem>> -> memref<1x128xf32, #tpu.memory_space<vmem>>
    %44 = tpu.memref_slice %arg6[%2] : memref<2x!tpu.dma_semaphore, #tpu.memory_space<semaphore_mem>> -> memref<1x!tpu.dma_semaphore, #tpu.memory_space<semaphore_mem>>
    %45 = tpu.memref_squeeze %44 : memref<1x!tpu.dma_semaphore, #tpu.memory_space<semaphore_mem>> -> memref<!tpu.dma_semaphore, #tpu.memory_space<semaphore_mem>>
    tpu.wait_dma2 semaphore(%45 : memref<!tpu.dma_semaphore, #tpu.memory_space<semaphore_mem>>) src(%42 : memref<1x128xf32, #tpu.memory_space<any>>) dst(%43 : memref<1x128xf32, #tpu.memory_space<vmem>>)
    %c0_i32_41 = arith.constant 0 : i32
    %c0_i32_42 = arith.constant 0 : i32
    %46 = tpu.memref_slice %arg3[%c0_i32_41, %c0_i32_42] : memref<512x128xf32, #tpu.memory_space<any>> -> memref<1x128xf32, #tpu.memory_space<any>>
    %c0_i32_43 = arith.constant 0 : i32
    %c0_i32_44 = arith.constant 0 : i32
    %47 = tpu.memref_slice %arg5[%c0_i32_43, %c0_i32_44] : memref<32x128xf32, #tpu.memory_space<vmem>> -> memref<1x128xf32, #tpu.memory_space<vmem>>
    %48 = tpu.memref_slice %arg6[%2] : memref<2x!tpu.dma_semaphore, #tpu.memory_space<semaphore_mem>> -> memref<1x!tpu.dma_semaphore, #tpu.memory_space<semaphore_mem>>
    %49 = tpu.memref_squeeze %48 : memref<1x!tpu.dma_semaphore, #tpu.memory_space<semaphore_mem>> -> memref<!tpu.dma_semaphore, #tpu.memory_space<semaphore_mem>>
    tpu.wait_dma2 semaphore(%49 : memref<!tpu.dma_semaphore, #tpu.memory_space<semaphore_mem>>) src(%46 : memref<1x128xf32, #tpu.memory_space<any>>) dst(%47 : memref<1x128xf32, #tpu.memory_space<vmem>>)
    %c0_i32_45 = arith.constant 0 : i32
    %c0_i32_46 = arith.constant 0 : i32
    %50 = tpu.memref_slice %arg3[%c0_i32_45, %c0_i32_46] : memref<512x128xf32, #tpu.memory_space<any>> -> memref<1x128xf32, #tpu.memory_space<any>>
    %c0_i32_47 = arith.constant 0 : i32
    %c0_i32_48 = arith.constant 0 : i32
    %51 = tpu.memref_slice %arg5[%c0_i32_47, %c0_i32_48] : memref<32x128xf32, #tpu.memory_space<vmem>> -> memref<1x128xf32, #tpu.memory_space<vmem>>
    %52 = tpu.memref_slice %arg6[%2] : memref<2x!tpu.dma_semaphore, #tpu.memory_space<semaphore_mem>> -> memref<1x!tpu.dma_semaphore, #tpu.memory_space<semaphore_mem>>
    %53 = tpu.memref_squeeze %52 : memref<1x!tpu.dma_semaphore, #tpu.memory_space<semaphore_mem>> -> memref<!tpu.dma_semaphore, #tpu.memory_space<semaphore_mem>>
    tpu.wait_dma2 semaphore(%53 : memref<!tpu.dma_semaphore, #tpu.memory_space<semaphore_mem>>) src(%50 : memref<1x128xf32, #tpu.memory_space<any>>) dst(%51 : memref<1x128xf32, #tpu.memory_space<vmem>>)
    %c0_i32_49 = arith.constant 0 : i32
    %c0_i32_50 = arith.constant 0 : i32
    %54 = tpu.memref_slice %arg3[%c0_i32_49, %c0_i32_50] : memref<512x128xf32, #tpu.memory_space<any>> -> memref<1x128xf32, #tpu.memory_space<any>>
    %c0_i32_51 = arith.constant 0 : i32
    %c0_i32_52 = arith.constant 0 : i32
    %55 = tpu.memref_slice %arg5[%c0_i32_51, %c0_i32_52] : memref<32x128xf32, #tpu.memory_space<vmem>> -> memref<1x128xf32, #tpu.memory_space<vmem>>
    %56 = tpu.memref_slice %arg6[%2] : memref<2x!tpu.dma_semaphore, #tpu.memory_space<semaphore_mem>> -> memref<1x!tpu.dma_semaphore, #tpu.memory_space<semaphore_mem>>
    %57 = tpu.memref_squeeze %56 : memref<1x!tpu.dma_semaphore, #tpu.memory_space<semaphore_mem>> -> memref<!tpu.dma_semaphore, #tpu.memory_space<semaphore_mem>>
    tpu.wait_dma2 semaphore(%57 : memref<!tpu.dma_semaphore, #tpu.memory_space<semaphore_mem>>) src(%54 : memref<1x128xf32, #tpu.memory_space<any>>) dst(%55 : memref<1x128xf32, #tpu.memory_space<vmem>>)
    %c0_i32_53 = arith.constant 0 : i32
    %c0_i32_54 = arith.constant 0 : i32
    %58 = tpu.memref_slice %arg3[%c0_i32_53, %c0_i32_54] : memref<512x128xf32, #tpu.memory_space<any>> -> memref<1x128xf32, #tpu.memory_space<any>>
    %c0_i32_55 = arith.constant 0 : i32
    %c0_i32_56 = arith.constant 0 : i32
    %59 = tpu.memref_slice %arg5[%c0_i32_55, %c0_i32_56] : memref<32x128xf32, #tpu.memory_space<vmem>> -> memref<1x128xf32, #tpu.memory_space<vmem>>
    %60 = tpu.memref_slice %arg6[%2] : memref<2x!tpu.dma_semaphore, #tpu.memory_space<semaphore_mem>> -> memref<1x!tpu.dma_semaphore, #tpu.memory_space<semaphore_mem>>
    %61 = tpu.memref_squeeze %60 : memref<1x!tpu.dma_semaphore, #tpu.memory_space<semaphore_mem>> -> memref<!tpu.dma_semaphore, #tpu.memory_space<semaphore_mem>>
    tpu.wait_dma2 semaphore(%61 : memref<!tpu.dma_semaphore, #tpu.memory_space<semaphore_mem>>) src(%58 : memref<1x128xf32, #tpu.memory_space<any>>) dst(%59 : memref<1x128xf32, #tpu.memory_space<vmem>>)
    %c0_i32_57 = arith.constant 0 : i32
    %c0_i32_58 = arith.constant 0 : i32
    %62 = tpu.memref_slice %arg3[%c0_i32_57, %c0_i32_58] : memref<512x128xf32, #tpu.memory_space<any>> -> memref<1x128xf32, #tpu.memory_space<any>>
    %c0_i32_59 = arith.constant 0 : i32
    %c0_i32_60 = arith.constant 0 : i32
    %63 = tpu.memref_slice %arg5[%c0_i32_59, %c0_i32_60] : memref<32x128xf32, #tpu.memory_space<vmem>> -> memref<1x128xf32, #tpu.memory_space<vmem>>
    %64 = tpu.memref_slice %arg6[%2] : memref<2x!tpu.dma_semaphore, #tpu.memory_space<semaphore_mem>> -> memref<1x!tpu.dma_semaphore, #tpu.memory_space<semaphore_mem>>
    %65 = tpu.memref_squeeze %64 : memref<1x!tpu.dma_semaphore, #tpu.memory_space<semaphore_mem>> -> memref<!tpu.dma_semaphore, #tpu.memory_space<semaphore_mem>>
    tpu.wait_dma2 semaphore(%65 : memref<!tpu.dma_semaphore, #tpu.memory_space<semaphore_mem>>) src(%62 : memref<1x128xf32, #tpu.memory_space<any>>) dst(%63 : memref<1x128xf32, #tpu.memory_space<vmem>>)
    %c0_i32_61 = arith.constant 0 : i32
    %c0_i32_62 = arith.constant 0 : i32
    %66 = tpu.memref_slice %arg3[%c0_i32_61, %c0_i32_62] : memref<512x128xf32, #tpu.memory_space<any>> -> memref<1x128xf32, #tpu.memory_space<any>>
    %c0_i32_63 = arith.constant 0 : i32
    %c0_i32_64 = arith.constant 0 : i32
    %67 = tpu.memref_slice %arg5[%c0_i32_63, %c0_i32_64] : memref<32x128xf32, #tpu.memory_space<vmem>> -> memref<1x128xf32, #tpu.memory_space<vmem>>
    %68 = tpu.memref_slice %arg6[%2] : memref<2x!tpu.dma_semaphore, #tpu.memory_space<semaphore_mem>> -> memref<1x!tpu.dma_semaphore, #tpu.memory_space<semaphore_mem>>
    %69 = tpu.memref_squeeze %68 : memref<1x!tpu.dma_semaphore, #tpu.memory_space<semaphore_mem>> -> memref<!tpu.dma_semaphore, #tpu.memory_space<semaphore_mem>>
    tpu.wait_dma2 semaphore(%69 : memref<!tpu.dma_semaphore, #tpu.memory_space<semaphore_mem>>) src(%66 : memref<1x128xf32, #tpu.memory_space<any>>) dst(%67 : memref<1x128xf32, #tpu.memory_space<vmem>>)
    %c0_i32_65 = arith.constant 0 : i32
    %c0_i32_66 = arith.constant 0 : i32
    %70 = tpu.memref_slice %arg3[%c0_i32_65, %c0_i32_66] : memref<512x128xf32, #tpu.memory_space<any>> -> memref<1x128xf32, #tpu.memory_space<any>>
    %c0_i32_67 = arith.constant 0 : i32
    %c0_i32_68 = arith.constant 0 : i32
    %71 = tpu.memref_slice %arg5[%c0_i32_67, %c0_i32_68] : memref<32x128xf32, #tpu.memory_space<vmem>> -> memref<1x128xf32, #tpu.memory_space<vmem>>
    %72 = tpu.memref_slice %arg6[%2] : memref<2x!tpu.dma_semaphore, #tpu.memory_space<semaphore_mem>> -> memref<1x!tpu.dma_semaphore, #tpu.memory_space<semaphore_mem>>
    %73 = tpu.memref_squeeze %72 : memref<1x!tpu.dma_semaphore, #tpu.memory_space<semaphore_mem>> -> memref<!tpu.dma_semaphore, #tpu.memory_space<semaphore_mem>>
    tpu.wait_dma2 semaphore(%73 : memref<!tpu.dma_semaphore, #tpu.memory_space<semaphore_mem>>) src(%70 : memref<1x128xf32, #tpu.memory_space<any>>) dst(%71 : memref<1x128xf32, #tpu.memory_space<vmem>>)
    %c16_i32 = arith.constant 16 : i32
    %74 = arith.muli %2, %c16_i32 : i32
    %75 = tpu.assume_multiple %74, 16 : i32
    %76 = arith.index_cast %75 : i32 to index
    %c0 = arith.constant 0 : index
    %77 = vector.load %arg5[%76, %c0] : memref<32x128xf32, #tpu.memory_space<vmem>>, vector<16x128xf32>
    %cst = arith.constant 11.3137083 : f32
    %78 = vector.broadcast %cst : f32 to vector<16x128xf32>
    %79 = arith.mulf %77, %78 : vector<16x128xf32>
    %c0_69 = arith.constant 0 : index
    %c0_70 = arith.constant 0 : index
    %80 = vector.load %arg4[%c0_69, %c0_70] : memref<16x128xf32, #tpu.memory_space<vmem>>, vector<16x128xf32>
    tpu.vector_store %arg4[%c0_69, %c0_70], %79 {strides = array<i32>} : memref<16x128xf32, #tpu.memory_space<vmem>>, vector<16x128xf32>,
    return
  }
  func.func @transform_1(%arg0: i32, %arg1: i32, %arg2: memref<16xi32, #tpu.memory_space<smem>>) -> (i32, i32) {
    %c1_i32 = arith.constant 1 : i32
    %0 = arith.muli %arg0, %c1_i32 : i32
    %1 = arith.addi %0, %arg1 : i32
    %c0_i32 = arith.constant 0 : i32
    %c0_i32_0 = arith.constant 0 : i32
    return %1, %c0_i32 : i32, i32
  }
}

</mosaic_0001>

<llo_original>
// kernel: tpu_custom_call.1
$region0: #{tpu_custom_call.1}
  #allocation0 [shape = 'u32[]', space=smem, size = 0x4, offset = 0x4, fixed_abs, tag = 'smem constant byte address 0x4 - core index']
  #allocation1 [shape = 'u32[144,128]{1,0:T(1,128)}', space=vmem, size = 0x12000, scoped, tag = 'internal scratch']
  #allocation2 [shape = 'f32[32,128]{1,0:T(8,128)}', space=vmem, size = 0x4000, scoped, tag = 'scratch operand']
  #allocation3 [shape = 's32[2]{0}', space=sflag, size = 0x8, scoped, tag = 'scratch operand']
  #allocation4 [shape = 's32[1]{0}', space=sflag, size = 0x4, scoped, tag = 'scoped memory for tpu_custom_call.1']
  #allocation5 [shape = 'u8[512]{0}', space=smem, size = 0x200, scoped, tag = 'prefetched SMEM operand 0']
  #allocation8 [shape = 's32[]', space=sflag, size = 0x4, offset = 0, fixed_abs, tag = 'sflag constant byte address 0x0 - dummy sync flag']
  #allocation9 [shape = 's32[]', space=sflag, size = 0x4, offset = 0, fixed_abs, tag = 'sflag constant byte address 0x0 - dummy sync flag']
  #allocation10 [shape = 'u32[]', space=smem, size = 0x4, offset = 0x44, fixed_abs, tag = 'smem constant byte address 0x44 - assertion arg 0']
  #allocation11 [shape = 'u32[]', space=smem, size = 0x4, offset = 0x48, fixed_abs, tag = 'smem constant byte address 0x48 - assertion arg 1']
  #allocation12 [shape = 's32[]', space=sflag, size = 0x4, offset = 0, fixed_abs, tag = 'sflag constant byte address 0x0 - dummy sync flag']
  #allocation13 [shape = 's32[]', space=sflag, size = 0x4, offset = 0, fixed_abs, tag = 'sflag constant byte address 0x0 - dummy sync flag']
  #allocation14 [shape = 's32[]', space=sflag, size = 0x4, offset = 0, fixed_abs, tag = 'sflag constant byte address 0x0 - dummy sync flag']
  #allocation15 [shape = 's32[]', space=sflag, size = 0x4, offset = 0, fixed_abs, tag = 'sflag constant byte address 0x0 - dummy sync flag']
  #allocation16 [shape = 's32[]', space=sflag, size = 0x4, offset = 0, fixed_abs, tag = 'sflag constant byte address 0x0 - dummy sync flag']
  #allocation17 [shape = 's32[]', space=sflag, size = 0x4, offset = 0, fixed_abs, tag = 'sflag constant byte address 0x0 - dummy sync flag']
  #allocation18 [shape = 's32[]', space=sflag, size = 0x4, offset = 0, fixed_abs, tag = 'sflag constant byte address 0x0 - dummy sync flag']
  #allocation19 [shape = 's32[]', space=sflag, size = 0x4, offset = 0, fixed_abs, tag = 'sflag constant byte address 0x0 - dummy sync flag']
  #allocation20 [shape = 's32[]', space=sflag, size = 0x4, offset = 0, fixed_abs, tag = 'sflag constant byte address 0x0 - dummy sync flag']
  #allocation21 [shape = 's32[]', space=sflag, size = 0x4, offset = 0, fixed_abs, tag = 'sflag constant byte address 0x0 - dummy sync flag']
  #allocation22 [shape = 's32[]', space=sflag, size = 0x4, offset = 0, fixed_abs, tag = 'sflag constant byte address 0x0 - dummy sync flag']
  #allocation23 [shape = 's32[]', space=sflag, size = 0x4, offset = 0, fixed_abs, tag = 'sflag constant byte address 0x0 - dummy sync flag']
  #allocation24 [shape = 's32[]', space=sflag, size = 0x4, offset = 0, fixed_abs, tag = 'sflag constant byte address 0x0 - dummy sync flag']
  #allocation25 [shape = 's32[]', space=sflag, size = 0x4, offset = 0, fixed_abs, tag = 'sflag constant byte address 0x0 - dummy sync flag']
  #allocation26 [shape = 's32[]', space=sflag, size = 0x4, offset = 0, fixed_abs, tag = 'sflag constant byte address 0x0 - dummy sync flag']
  #allocation27 [shape = 's32[]', space=sflag, size = 0x4, offset = 0, fixed_abs, tag = 'sflag constant byte address 0x0 - dummy sync flag']
  #allocation28 [shape = 's32[]', space=sflag, size = 0x4, offset = 0, fixed_abs, tag = 'sflag constant byte address 0x0 - dummy sync flag']
  #allocation29 [shape = 's32[]', space=sflag, size = 0x4, offset = 0, fixed_abs, tag = 'sflag constant byte address 0x0 - dummy sync flag']
  #allocation30 [shape = 's32[]', space=sflag, size = 0x4, offset = 0, fixed_abs, tag = 'sflag constant byte address 0x0 - dummy sync flag']
  #allocation31 [shape = 's32[]', space=sflag, size = 0x4, offset = 0, fixed_abs, tag = 'sflag constant byte address 0x0 - dummy sync flag']
  #allocation32 [shape = 's32[]', space=sflag, size = 0x4, offset = 0, fixed_abs, tag = 'sflag constant byte address 0x0 - dummy sync flag']
  #allocation33 [shape = 's32[]', space=sflag, size = 0x4, offset = 0, fixed_abs, tag = 'sflag constant byte address 0x0 - dummy sync flag']
  #allocation34 [shape = 's32[]', space=sflag, size = 0x4, offset = 0, fixed_abs, tag = 'sflag constant byte address 0x0 - dummy sync flag']
  #allocation35 [shape = 's32[]', space=sflag, size = 0x4, offset = 0, fixed_abs, tag = 'sflag constant byte address 0x0 - dummy sync flag']
  #allocation36 [shape = 's32[]', space=sflag, size = 0x4, offset = 0, fixed_abs, tag = 'sflag constant byte address 0x0 - dummy sync flag']
  #allocation37 [shape = 's32[]', space=sflag, size = 0x4, offset = 0, fixed_abs, tag = 'sflag constant byte address 0x0 - dummy sync flag']
  #allocation38 [shape = 's32[]', space=sflag, size = 0x4, offset = 0, fixed_abs, tag = 'sflag constant byte address 0x0 - dummy sync flag']
  #allocation39 [shape = 's32[]', space=sflag, size = 0x4, offset = 0, fixed_abs, tag = 'sflag constant byte address 0x0 - dummy sync flag']
  #allocation40 [shape = 's32[]', space=sflag, size = 0x4, offset = 0, fixed_abs, tag = 'sflag constant byte address 0x0 - dummy sync flag']
  #allocation41 [shape = 's32[]', space=sflag, size = 0x4, offset = 0, fixed_abs, tag = 'sflag constant byte address 0x0 - dummy sync flag']
  #allocation42 [shape = 's32[]', space=sflag, size = 0x4, offset = 0, fixed_abs, tag = 'sflag constant byte address 0x0 - dummy sync flag']
  #allocation43 [shape = 's32[]', space=sflag, size = 0x4, offset = 0, fixed_abs, tag = 'sflag constant byte address 0x0 - dummy sync flag']
  #allocation44 [shape = 's32[]', space=sflag, size = 0x4, offset = 0, fixed_abs, tag = 'sflag constant byte address 0x0 - dummy sync flag']
  #allocation45 [shape = 's32[]', space=sflag, size = 0x4, offset = 0, fixed_abs, tag = 'sflag constant byte address 0x0 - dummy sync flag']
  #allocation46 [shape = 's32[]', space=sflag, size = 0x4, offset = 0, fixed_abs, tag = 'sflag constant byte address 0x0 - dummy sync flag']
  #allocation47 [shape = 's32[]', space=sflag, size = 0x4, offset = 0, fixed_abs, tag = 'sflag constant byte address 0x0 - dummy sync flag']
  #allocation48 [shape = 's32[]', space=sflag, size = 0x4, offset = 0, fixed_abs, tag = 'sflag constant byte address 0x0 - dummy sync flag']
  #allocation49 [shape = 's32[]', space=sflag, size = 0x4, offset = 0, fixed_abs, tag = 'sflag constant byte address 0x0 - dummy sync flag']
  #allocation50 [shape = 's32[]', space=sflag, size = 0x4, offset = 0, fixed_abs, tag = 'sflag constant byte address 0x0 - dummy sync flag']
  #allocation51 [shape = 's32[]', space=sflag, size = 0x4, offset = 0, fixed_abs, tag = 'sflag constant byte address 0x0 - dummy sync flag']
  #allocation52 [shape = 's32[]', space=sflag, size = 0x4, offset = 0, fixed_abs, tag = 'sflag constant byte address 0x0 - dummy sync flag']
  #allocation53 [shape = 's32[]', space=sflag, size = 0x4, offset = 0, fixed_abs, tag = 'sflag constant byte address 0x0 - dummy sync flag']
  #allocation54 [shape = 's32[]', space=sflag, size = 0x4, offset = 0, fixed_abs, tag = 'sflag constant byte address 0x0 - dummy sync flag']
  #allocation55 [shape = 's32[]', space=sflag, size = 0x4, offset = 0, fixed_abs, tag = 'sflag constant byte address 0x0 - dummy sync flag']
  #allocation56 [shape = 's32[]', space=sflag, size = 0x4, offset = 0, fixed_abs, tag = 'sflag constant byte address 0x0 - dummy sync flag']
  #allocation57 [shape = 's32[]', space=sflag, size = 0x4, offset = 0, fixed_abs, tag = 'sflag constant byte address 0x0 - dummy sync flag']
  #allocation58 [shape = 's32[]', space=sflag, size = 0x4, offset = 0, fixed_abs, tag = 'sflag constant byte address 0x0 - dummy sync flag']
  #allocation59 [shape = 's32[]', space=sflag, size = 0x4, offset = 0, fixed_abs, tag = 'sflag constant byte address 0x0 - dummy sync flag']
  #allocation60 [shape = 's32[]', space=sflag, size = 0x4, offset = 0, fixed_abs, tag = 'sflag constant byte address 0x0 - dummy sync flag']
  #allocation61 [shape = 's32[]', space=sflag, size = 0x4, offset = 0, fixed_abs, tag = 'sflag constant byte address 0x0 - dummy sync flag']
  #allocation62 [shape = 's32[]', space=sflag, size = 0x4, offset = 0, fixed_abs, tag = 'sflag constant byte address 0x0 - dummy sync flag']
  #allocation63 [shape = 's32[]', space=sflag, size = 0x4, offset = 0, fixed_abs, tag = 'sflag constant byte address 0x0 - dummy sync flag']
  #allocation64 [shape = 's32[]', space=sflag, size = 0x4, offset = 0, fixed_abs, tag = 'sflag constant byte address 0x0 - dummy sync flag']
  #allocation65 [shape = 's32[]', space=sflag, size = 0x4, offset = 0, fixed_abs, tag = 'sflag constant byte address 0x0 - dummy sync flag']
  #allocation66 [shape = 's32[]', space=sflag, size = 0x4, offset = 0, fixed_abs, tag = 'sflag constant byte address 0x0 - dummy sync flag']
  #allocation67 [shape = 's32[]', space=sflag, size = 0x4, offset = 0, fixed_abs, tag = 'sflag constant byte address 0x0 - dummy sync flag']
  #allocation68 [shape = 's32[]', space=sflag, size = 0x4, offset = 0, fixed_abs, tag = 'sflag constant byte address 0x0 - dummy sync flag']
  #allocation69 [shape = 's32[]', space=sflag, size = 0x4, offset = 0, fixed_abs, tag = 'sflag constant byte address 0x0 - dummy sync flag']
  #allocation70 [shape = 's32[]', space=sflag, size = 0x4, offset = 0, fixed_abs, tag = 'sflag constant byte address 0x0 - dummy sync flag']
  #allocation71 [shape = 's32[]', space=sflag, size = 0x4, offset = 0, fixed_abs, tag = 'sflag constant byte address 0x0 - dummy sync flag']
  #allocation72 [shape = 's32[]', space=sflag, size = 0x4, offset = 0, fixed_abs, tag = 'sflag constant byte address 0x0 - dummy sync flag']
  #allocation73 [shape = 's32[]', space=sflag, size = 0x4, offset = 0, fixed_abs, tag = 'sflag constant byte address 0x0 - dummy sync flag']
  %s0 = inlined_call_operand.hbm [shape: s32[16], index: 0, kind: input, shape index: {}]
  %s1 = inlined_call_operand.hbm [shape: f32[512,128], index: 1, kind: input, shape index: {}]
  %s2 = inlined_call_operand.hbm [shape: f32[16,128], index: 2, kind: output, shape index: {}]
  %s3 = sld [smem:[#allocation0]]
  $region146: #{tpu_custom_call.1} parent=0
    _
  %s5 = ssub.s32 1, %s3
  %s6 = scalar_select 0, %s5, %s3
  %8 = dma.hbm_to_smem %s0, 16, [#allocation5], [#allocation4]
  %9 = dma.done [#allocation4], 16
  %10 = sfence
  $region1: #{tpu_custom_call.1} parent=0
    #allocation6 [shape = 'u8[8192]{0}', space=vmem, size = 0x2000, scoped, tag = 'output window, operand 0, single buffered']
    #allocation7 [shape = 's32[1]{0}', space=sflag, size = 0x4, scoped, tag = 'scoped memory for tpu_custom_call.1']
    %11 = vsyncpa [#allocation7], 0
    %s12 = sadd.s32 0, 0
    %s13 = smul.u32 2, %s12
    %s14 = sadd.s32 0, 0
    %s15 = sand.u32 0, 1
    %p16 = scmp.eq.s32.totalorder 0, 0
    // Predicated region
    $region2: #{tpu_custom_call.1} parent=1 // pred_check
      %p17 = pneg %p16
    $region3: #{tpu_custom_call.1} parent=1 // pred_check_branch
      %19 = sbr.rel (%p17) target = $region5
    $region4: #{tpu_custom_call.1} parent=1 // pred_region
      %s20 = smul.u32 %s14, 16
      %s21 = smul.u32 %s15, 16
      %s22 = sld [smem:[#allocation5 + %s20]]
      %s23 = smul.addr %s22, 16
      %s24 = scalar_lea.hbm %s1, %s23
      %s25 = scalar_lea.vmem [#allocation2], %s21
      %s26 = scalar_lea.sflag [#allocation3], %s15
      // Predicated region
      $region6: #{tpu_custom_call.1} parent=4 // pred_check
        _
      $region7: #{tpu_custom_call.1} parent=4 // pred_check_branch
        %28 = sbr.rel target = $region9
      $region8: #{tpu_custom_call.1} parent=4 // pred_region
        %29 = sst [smem:[#allocation10]] [#allocation9]
        %30 = sst [smem:[#allocation11]] [#allocation8]
      $region9: #{tpu_custom_call.1} parent=4 // pred_fallthru
        _
      %32 = shalt.err (0)
      %s34 = sshll.u32 %s25, 4
      %s35 = int_to_ptr.vmem [resolvable:$true] %s34
      %37 = dma.hbm_to_vmem [thread:$0]  %s24, 16, %s35, %s26
      %s38 = sadd.s32 %s20, 1
      %s39 = sld [smem:[#allocation5 + %s38]]
      %s40 = sadd.s32 %s21, 1
      %s41 = smul.addr %s39, 16
      %s42 = scalar_lea.hbm %s1, %s41
      %s43 = scalar_lea.vmem [#allocation2], %s40
      // Predicated region
      $region10: #{tpu_custom_call.1} parent=4 // pred_check
        _
      $region11: #{tpu_custom_call.1} parent=4 // pred_check_branch
        %45 = sbr.rel target = $region13
      $region12: #{tpu_custom_call.1} parent=4 // pred_region
        %46 = sst [smem:[#allocation10]] [#allocation13]
        %47 = sst [smem:[#allocation11]] [#allocation12]
      $region13: #{tpu_custom_call.1} parent=4 // pred_fallthru
        _
      %49 = shalt.err (0)
      %s51 = sshll.u32 %s43, 4
      %s52 = int_to_ptr.vmem [resolvable:$true] %s51
      %54 = dma.hbm_to_vmem [thread:$0]  %s42, 16, %s52, %s26
      %s55 = sadd.s32 %s20, 2
      %s56 = sld [smem:[#allocation5 + %s55]]
      %s57 = sadd.s32 %s21, 2
      %s58 = smul.addr %s56, 16
      %s59 = scalar_lea.hbm %s1, %s58
      %s60 = scalar_lea.vmem [#allocation2], %s57
      // Predicated region
      $region14: #{tpu_custom_call.1} parent=4 // pred_check
        _
      $region15: #{tpu_custom_call.1} parent=4 // pred_check_branch
        %62 = sbr.rel target = $region17
      $region16: #{tpu_custom_call.1} parent=4 // pred_region
        %63 = sst [smem:[#allocation10]] [#allocation15]
        %64 = sst [smem:[#allocation11]] [#allocation14]
      $region17: #{tpu_custom_call.1} parent=4 // pred_fallthru
        _
      %66 = shalt.err (0)
      %s68 = sshll.u32 %s60, 4
      %s69 = int_to_ptr.vmem [resolvable:$true] %s68
      %71 = dma.hbm_to_vmem [thread:$0]  %s59, 16, %s69, %s26
      %s72 = sadd.s32 %s20, 3
      %s73 = sld [smem:[#allocation5 + %s72]]
      %s74 = sadd.s32 %s21, 3
      %s75 = smul.addr %s73, 16
      %s76 = scalar_lea.hbm %s1, %s75
      %s77 = scalar_lea.vmem [#allocation2], %s74
      // Predicated region
      $region18: #{tpu_custom_call.1} parent=4 // pred_check
        _
      $region19: #{tpu_custom_call.1} parent=4 // pred_check_branch
        %79 = sbr.rel target = $region21
      $region20: #{tpu_custom_call.1} parent=4 // pred_region
        %80 = sst [smem:[#allocation10]] [#allocation17]
        %81 = sst [smem:[#allocation11]] [#allocation16]
      $region21: #{tpu_custom_call.1} parent=4 // pred_fallthru
        _
      %83 = shalt.err (0)
      %s85 = sshll.u32 %s77, 4
      %s86 = int_to_ptr.vmem [resolvable:$true] %s85
      %88 = dma.hbm_to_vmem [thread:$0]  %s76, 16, %s86, %s26
      %s89 = sadd.s32 %s20, 4
      %s90 = sld [smem:[#allocation5 + %s89]]
      %s91 = sadd.s32 %s21, 4
      %s92 = smul.addr %s90, 16
      %s93 = scalar_lea.hbm %s1, %s92
      %s94 = scalar_lea.vmem [#allocation2], %s91
      // Predicated region
      $region22: #{tpu_custom_call.1} parent=4 // pred_check
        _
      $region23: #{tpu_custom_call.1} parent=4 // pred_check_branch
        %96 = sbr.rel target = $region25
      $region24: #{tpu_custom_call.1} parent=4 // pred_region
        %97 = sst [smem:[#allocation10]] [#allocation19]
        %98 = sst [smem:[#allocation11]] [#allocation18]
      $region25: #{tpu_custom_call.1} parent=4 // pred_fallthru
        _
      %100 = shalt.err (0)
      %s102 = sshll.u32 %s94, 4
      %s103 = int_to_ptr.vmem [resolvable:$true] %s102
      %105 = dma.hbm_to_vmem [thread:$0]  %s93, 16, %s103, %s26
      %s106 = sadd.s32 %s20, 5
      %s107 = sld [smem:[#allocation5 + %s106]]
      %s108 = sadd.s32 %s21, 5
      %s109 = smul.addr %s107, 16
      %s110 = scalar_lea.hbm %s1, %s109
      %s111 = scalar_lea.vmem [#allocation2], %s108
      // Predicated region
      $region26: #{tpu_custom_call.1} parent=4 // pred_check
        _
      $region27: #{tpu_custom_call.1} parent=4 // pred_check_branch
        %113 = sbr.rel target = $region29
      $region28: #{tpu_custom_call.1} parent=4 // pred_region
        %114 = sst [smem:[#allocation10]] [#allocation21]
        %115 = sst [smem:[#allocation11]] [#allocation20]
      $region29: #{tpu_custom_call.1} parent=4 // pred_fallthru
        _
      %117 = shalt.err (0)
      %s119 = sshll.u32 %s111, 4
      %s120 = int_to_ptr.vmem [resolvable:$true] %s119
      %122 = dma.hbm_to_vmem [thread:$0]  %s110, 16, %s120, %s26
      %s123 = sadd.s32 %s20, 6
      %s124 = sld [smem:[#allocation5 + %s123]]
      %s125 = sadd.s32 %s21, 6
      %s126 = smul.addr %s124, 16
      %s127 = scalar_lea.hbm %s1, %s126
      %s128 = scalar_lea.vmem [#allocation2], %s125
      // Predicated region
      $region30: #{tpu_custom_call.1} parent=4 // pred_check
        _
      $region31: #{tpu_custom_call.1} parent=4 // pred_check_branch
        %130 = sbr.rel target = $region33
      $region32: #{tpu_custom_call.1} parent=4 // pred_region
        %131 = sst [smem:[#allocation10]] [#allocation23]
        %132 = sst [smem:[#allocation11]] [#allocation22]
      $region33: #{tpu_custom_call.1} parent=4 // pred_fallthru
        _
      %134 = shalt.err (0)
      %s136 = sshll.u32 %s128, 4
      %s137 = int_to_ptr.vmem [resolvable:$true] %s136
      %139 = dma.hbm_to_vmem [thread:$0]  %s127, 16, %s137, %s26
      %s140 = sadd.s32 %s20, 7
      %s141 = sld [smem:[#allocation5 + %s140]]
      %s142 = sadd.s32 %s21, 7
      %s143 = smul.addr %s141, 16
      %s144 = scalar_lea.hbm %s1, %s143
      %s145 = scalar_lea.vmem [#allocation2], %s142
      // Predicated region
      $region34: #{tpu_custom_call.1} parent=4 // pred_check
        _
      $region35: #{tpu_custom_call.1} parent=4 // pred_check_branch
        %147 = sbr.rel target = $region37
      $region36: #{tpu_custom_call.1} parent=4 // pred_region
        %148 = sst [smem:[#allocation10]] [#allocation25]
        %149 = sst [smem:[#allocation11]] [#allocation24]
      $region37: #{tpu_custom_call.1} parent=4 // pred_fallthru
        _
      %151 = shalt.err (0)
      %s153 = sshll.u32 %s145, 4
      %s154 = int_to_ptr.vmem [resolvable:$true] %s153
      %156 = dma.hbm_to_vmem [thread:$0]  %s144, 16, %s154, %s26
      %s157 = sadd.s32 %s20, 8
      %s158 = sld [smem:[#allocation5 + %s157]]
      %s159 = sadd.s32 %s21, 8
      %s160 = smul.addr %s158, 16
      %s161 = scalar_lea.hbm %s1, %s160
      %s162 = scalar_lea.vmem [#allocation2], %s159
      // Predicated region
      $region38: #{tpu_custom_call.1} parent=4 // pred_check
        _
      $region39: #{tpu_custom_call.1} parent=4 // pred_check_branch
        %164 = sbr.rel target = $region41
      $region40: #{tpu_custom_call.1} parent=4 // pred_region
        %165 = sst [smem:[#allocation10]] [#allocation27]
        %166 = sst [smem:[#allocation11]] [#allocation26]
      $region41: #{tpu_custom_call.1} parent=4 // pred_fallthru
        _
      %168 = shalt.err (0)
      %s170 = sshll.u32 %s162, 4
      %s171 = int_to_ptr.vmem [resolvable:$true] %s170
      %173 = dma.hbm_to_vmem [thread:$0]  %s161, 16, %s171, %s26
      %s174 = sadd.s32 %s20, 9
      %s175 = sld [smem:[#allocation5 + %s174]]
      %s176 = sadd.s32 %s21, 9
      %s177 = smul.addr %s175, 16
      %s178 = scalar_lea.hbm %s1, %s177
      %s179 = scalar_lea.vmem [#allocation2], %s176
      // Predicated region
      $region42: #{tpu_custom_call.1} parent=4 // pred_check
        _
      $region43: #{tpu_custom_call.1} parent=4 // pred_check_branch
        %181 = sbr.rel target = $region45
      $region44: #{tpu_custom_call.1} parent=4 // pred_region
        %182 = sst [smem:[#allocation10]] [#allocation29]
        %183 = sst [smem:[#allocation11]] [#allocation28]
      $region45: #{tpu_custom_call.1} parent=4 // pred_fallthru
        _
      %185 = shalt.err (0)
      %s187 = sshll.u32 %s179, 4
      %s188 = int_to_ptr.vmem [resolvable:$true] %s187
      %190 = dma.hbm_to_vmem [thread:$0]  %s178, 16, %s188, %s26
      %s191 = sadd.s32 %s20, 10
      %s192 = sld [smem:[#allocation5 + %s191]]
      %s193 = sadd.s32 %s21, 10
      %s194 = smul.addr %s192, 16
      %s195 = scalar_lea.hbm %s1, %s194
      %s196 = scalar_lea.vmem [#allocation2], %s193
      // Predicated region
      $region46: #{tpu_custom_call.1} parent=4 // pred_check
        _
      $region47: #{tpu_custom_call.1} parent=4 // pred_check_branch
        %198 = sbr.rel target = $region49
      $region48: #{tpu_custom_call.1} parent=4 // pred_region
        %199 = sst [smem:[#allocation10]] [#allocation31]
        %200 = sst [smem:[#allocation11]] [#allocation30]
      $region49: #{tpu_custom_call.1} parent=4 // pred_fallthru
        _
      %202 = shalt.err (0)
      %s204 = sshll.u32 %s196, 4
      %s205 = int_to_ptr.vmem [resolvable:$true] %s204
      %207 = dma.hbm_to_vmem [thread:$0]  %s195, 16, %s205, %s26
      %s208 = sadd.s32 %s20, 11
      %s209 = sld [smem:[#allocation5 + %s208]]
      %s210 = sadd.s32 %s21, 11
      %s211 = smul.addr %s209, 16
      %s212 = scalar_lea.hbm %s1, %s211
      %s213 = scalar_lea.vmem [#allocation2], %s210
      // Predicated region
      $region50: #{tpu_custom_call.1} parent=4 // pred_check
        _
      $region51: #{tpu_custom_call.1} parent=4 // pred_check_branch
        %215 = sbr.rel target = $region53
      $region52: #{tpu_custom_call.1} parent=4 // pred_region
        %216 = sst [smem:[#allocation10]] [#allocation33]
        %217 = sst [smem:[#allocation11]] [#allocation32]
      $region53: #{tpu_custom_call.1} parent=4 // pred_fallthru
        _
      %219 = shalt.err (0)
      %s221 = sshll.u32 %s213, 4
      %s222 = int_to_ptr.vmem [resolvable:$true] %s221
      %224 = dma.hbm_to_vmem [thread:$0]  %s212, 16, %s222, %s26
      %s225 = sadd.s32 %s20, 12
      %s226 = sld [smem:[#allocation5 + %s225]]
      %s227 = sadd.s32 %s21, 12
      %s228 = smul.addr %s226, 16
      %s229 = scalar_lea.hbm %s1, %s228
      %s230 = scalar_lea.vmem [#allocation2], %s227
      // Predicated region
      $region54: #{tpu_custom_call.1} parent=4 // pred_check
        _
      $region55: #{tpu_custom_call.1} parent=4 // pred_check_branch
        %232 = sbr.rel target = $region57
      $region56: #{tpu_custom_call.1} parent=4 // pred_region
        %233 = sst [smem:[#allocation10]] [#allocation35]
        %234 = sst [smem:[#allocation11]] [#allocation34]
      $region57: #{tpu_custom_call.1} parent=4 // pred_fallthru
        _
      %236 = shalt.err (0)
      %s238 = sshll.u32 %s230, 4
      %s239 = int_to_ptr.vmem [resolvable:$true] %s238
      %241 = dma.hbm_to_vmem [thread:$0]  %s229, 16, %s239, %s26
      %s242 = sadd.s32 %s20, 13
      %s243 = sld [smem:[#allocation5 + %s242]]
      %s244 = sadd.s32 %s21, 13
      %s245 = smul.addr %s243, 16
      %s246 = scalar_lea.hbm %s1, %s245
      %s247 = scalar_lea.vmem [#allocation2], %s244
      // Predicated region
      $region58: #{tpu_custom_call.1} parent=4 // pred_check
        _
      $region59: #{tpu_custom_call.1} parent=4 // pred_check_branch
        %249 = sbr.rel target = $region61
      $region60: #{tpu_custom_call.1} parent=4 // pred_region
        %250 = sst [smem:[#allocation10]] [#allocation37]
        %251 = sst [smem:[#allocation11]] [#allocation36]
      $region61: #{tpu_custom_call.1} parent=4 // pred_fallthru
        _
      %253 = shalt.err (0)
      %s255 = sshll.u32 %s247, 4
      %s256 = int_to_ptr.vmem [resolvable:$true] %s255
      %258 = dma.hbm_to_vmem [thread:$0]  %s246, 16, %s256, %s26
      %s259 = sadd.s32 %s20, 14
      %s260 = sld [smem:[#allocation5 + %s259]]
      %s261 = sadd.s32 %s21, 14
      %s262 = smul.addr %s260, 16
      %s263 = scalar_lea.hbm %s1, %s262
      %s264 = scalar_lea.vmem [#allocation2], %s261
      // Predicated region
      $region62: #{tpu_custom_call.1} parent=4 // pred_check
        _
      $region63: #{tpu_custom_call.1} parent=4 // pred_check_branch
        %266 = sbr.rel target = $region65
      $region64: #{tpu_custom_call.1} parent=4 // pred_region
        %267 = sst [smem:[#allocation10]] [#allocation39]
        %268 = sst [smem:[#allocation11]] [#allocation38]
      $region65: #{tpu_custom_call.1} parent=4 // pred_fallthru
        _
      %270 = shalt.err (0)
      %s272 = sshll.u32 %s264, 4
      %s273 = int_to_ptr.vmem [resolvable:$true] %s272
      %275 = dma.hbm_to_vmem [thread:$0]  %s263, 16, %s273, %s26
      %s276 = sadd.s32 %s20, 15
      %s277 = sld [smem:[#allocation5 + %s276]]
      %s278 = sadd.s32 %s21, 15
      %s279 = smul.addr %s277, 16
      %s280 = scalar_lea.hbm %s1, %s279
      %s281 = scalar_lea.vmem [#allocation2], %s278
      // Predicated region
      $region66: #{tpu_custom_call.1} parent=4 // pred_check
        _
      $region67: #{tpu_custom_call.1} parent=4 // pred_check_branch
        %283 = sbr.rel target = $region69
      $region68: #{tpu_custom_call.1} parent=4 // pred_region
        %284 = sst [smem:[#allocation10]] [#allocation41]
        %285 = sst [smem:[#allocation11]] [#allocation40]
      $region69: #{tpu_custom_call.1} parent=4 // pred_fallthru
        _
      %287 = shalt.err (0)
      %s289 = sshll.u32 %s281, 4
      %s290 = int_to_ptr.vmem [resolvable:$true] %s289
      %292 = dma.hbm_to_vmem [thread:$0]  %s280, 16, %s290, %s26
    $region5: #{tpu_custom_call.1} parent=1 // pred_fallthru
      _
    %s293 = sadd.s32 0, 1
    %p294 = scmp.lt.s32.totalorder %s293, 1
    // Predicated region
    $region70: #{tpu_custom_call.1} parent=1 // pred_check
      %p295 = pneg %p294
    $region71: #{tpu_custom_call.1} parent=1 // pred_check_branch
      %297 = sbr.rel (%p295) target = $region73
    $region72: #{tpu_custom_call.1} parent=1 // pred_region
      %s298 = sadd.s32 %s14, 1
      %s299 = ssub.s32 1, %s15
      %s300 = smul.u32 %s298, 16
      %s301 = smul.u32 %s299, 16
      %s302 = sld [smem:[#allocation5 + %s300]]
      %s303 = smul.addr %s302, 16
      %s304 = scalar_lea.hbm %s1, %s303
      %s305 = scalar_lea.vmem [#allocation2], %s301
      %s306 = scalar_lea.sflag [#allocation3], %s299
      // Predicated region
      $region74: #{tpu_custom_call.1} parent=72 // pred_check
        _
      $region75: #{tpu_custom_call.1} parent=72 // pred_check_branch
        %308 = sbr.rel target = $region77
      $region76: #{tpu_custom_call.1} parent=72 // pred_region
        %309 = sst [smem:[#allocation10]] [#allocation43]
        %310 = sst [smem:[#allocation11]] [#allocation42]
      $region77: #{tpu_custom_call.1} parent=72 // pred_fallthru
        _
      %312 = shalt.err (0)
      %s314 = sshll.u32 %s305, 4
      %s315 = int_to_ptr.vmem [resolvable:$true] %s314
      %317 = dma.hbm_to_vmem [thread:$0]  %s304, 16, %s315, %s306
      %s318 = sadd.s32 %s300, 1
      %s319 = sld [smem:[#allocation5 + %s318]]
      %s320 = sadd.s32 %s301, 1
      %s321 = smul.addr %s319, 16
      %s322 = scalar_lea.hbm %s1, %s321
      %s323 = scalar_lea.vmem [#allocation2], %s320
      // Predicated region
      $region78: #{tpu_custom_call.1} parent=72 // pred_check
        _
      $region79: #{tpu_custom_call.1} parent=72 // pred_check_branch
        %325 = sbr.rel target = $region81
      $region80: #{tpu_custom_call.1} parent=72 // pred_region
        %326 = sst [smem:[#allocation10]] [#allocation45]
        %327 = sst [smem:[#allocation11]] [#allocation44]
      $region81: #{tpu_custom_call.1} parent=72 // pred_fallthru
        _
      %329 = shalt.err (0)
      %s331 = sshll.u32 %s323, 4
      %s332 = int_to_ptr.vmem [resolvable:$true] %s331
      %334 = dma.hbm_to_vmem [thread:$0]  %s322, 16, %s332, %s306
      %s335 = sadd.s32 %s300, 2
      %s336 = sld [smem:[#allocation5 + %s335]]
      %s337 = sadd.s32 %s301, 2
      %s338 = smul.addr %s336, 16
      %s339 = scalar_lea.hbm %s1, %s338
      %s340 = scalar_lea.vmem [#allocation2], %s337
      // Predicated region
      $region82: #{tpu_custom_call.1} parent=72 // pred_check
        _
      $region83: #{tpu_custom_call.1} parent=72 // pred_check_branch
        %342 = sbr.rel target = $region85
      $region84: #{tpu_custom_call.1} parent=72 // pred_region
        %343 = sst [smem:[#allocation10]] [#allocation47]
        %344 = sst [smem:[#allocation11]] [#allocation46]
      $region85: #{tpu_custom_call.1} parent=72 // pred_fallthru
        _
      %346 = shalt.err (0)
      %s348 = sshll.u32 %s340, 4
      %s349 = int_to_ptr.vmem [resolvable:$true] %s348
      %351 = dma.hbm_to_vmem [thread:$0]  %s339, 16, %s349, %s306
      %s352 = sadd.s32 %s300, 3
      %s353 = sld [smem:[#allocation5 + %s352]]
      %s354 = sadd.s32 %s301, 3
      %s355 = smul.addr %s353, 16
      %s356 = scalar_lea.hbm %s1, %s355
      %s357 = scalar_lea.vmem [#allocation2], %s354
      // Predicated region
      $region86: #{tpu_custom_call.1} parent=72 // pred_check
        _
      $region87: #{tpu_custom_call.1} parent=72 // pred_check_branch
        %359 = sbr.rel target = $region89
      $region88: #{tpu_custom_call.1} parent=72 // pred_region
        %360 = sst [smem:[#allocation10]] [#allocation49]
        %361 = sst [smem:[#allocation11]] [#allocation48]
      $region89: #{tpu_custom_call.1} parent=72 // pred_fallthru
        _
      %363 = shalt.err (0)
      %s365 = sshll.u32 %s357, 4
      %s366 = int_to_ptr.vmem [resolvable:$true] %s365
      %368 = dma.hbm_to_vmem [thread:$0]  %s356, 16, %s366, %s306
      %s369 = sadd.s32 %s300, 4
      %s370 = sld [smem:[#allocation5 + %s369]]
      %s371 = sadd.s32 %s301, 4
      %s372 = smul.addr %s370, 16
      %s373 = scalar_lea.hbm %s1, %s372
      %s374 = scalar_lea.vmem [#allocation2], %s371
      // Predicated region
      $region90: #{tpu_custom_call.1} parent=72 // pred_check
        _
      $region91: #{tpu_custom_call.1} parent=72 // pred_check_branch
        %376 = sbr.rel target = $region93
      $region92: #{tpu_custom_call.1} parent=72 // pred_region
        %377 = sst [smem:[#allocation10]] [#allocation51]
        %378 = sst [smem:[#allocation11]] [#allocation50]
      $region93: #{tpu_custom_call.1} parent=72 // pred_fallthru
        _
      %380 = shalt.err (0)
      %s382 = sshll.u32 %s374, 4
      %s383 = int_to_ptr.vmem [resolvable:$true] %s382
      %385 = dma.hbm_to_vmem [thread:$0]  %s373, 16, %s383, %s306
      %s386 = sadd.s32 %s300, 5
      %s387 = sld [smem:[#allocation5 + %s386]]
      %s388 = sadd.s32 %s301, 5
      %s389 = smul.addr %s387, 16
      %s390 = scalar_lea.hbm %s1, %s389
      %s391 = scalar_lea.vmem [#allocation2], %s388
      // Predicated region
      $region94: #{tpu_custom_call.1} parent=72 // pred_check
        _
      $region95: #{tpu_custom_call.1} parent=72 // pred_check_branch
        %393 = sbr.rel target = $region97
      $region96: #{tpu_custom_call.1} parent=72 // pred_region
        %394 = sst [smem:[#allocation10]] [#allocation53]
        %395 = sst [smem:[#allocation11]] [#allocation52]
      $region97: #{tpu_custom_call.1} parent=72 // pred_fallthru
        _
      %397 = shalt.err (0)
      %s399 = sshll.u32 %s391, 4
      %s400 = int_to_ptr.vmem [resolvable:$true] %s399
      %402 = dma.hbm_to_vmem [thread:$0]  %s390, 16, %s400, %s306
      %s403 = sadd.s32 %s300, 6
      %s404 = sld [smem:[#allocation5 + %s403]]
      %s405 = sadd.s32 %s301, 6
      %s406 = smul.addr %s404, 16
      %s407 = scalar_lea.hbm %s1, %s406
      %s408 = scalar_lea.vmem [#allocation2], %s405
      // Predicated region
      $region98: #{tpu_custom_call.1} parent=72 // pred_check
        _
      $region99: #{tpu_custom_call.1} parent=72 // pred_check_branch
        %410 = sbr.rel target = $region101
      $region100: #{tpu_custom_call.1} parent=72 // pred_region
        %411 = sst [smem:[#allocation10]] [#allocation55]
        %412 = sst [smem:[#allocation11]] [#allocation54]
      $region101: #{tpu_custom_call.1} parent=72 // pred_fallthru
        _
      %414 = shalt.err (0)
      %s416 = sshll.u32 %s408, 4
      %s417 = int_to_ptr.vmem [resolvable:$true] %s416
      %419 = dma.hbm_to_vmem [thread:$0]  %s407, 16, %s417, %s306
      %s420 = sadd.s32 %s300, 7
      %s421 = sld [smem:[#allocation5 + %s420]]
      %s422 = sadd.s32 %s301, 7
      %s423 = smul.addr %s421, 16
      %s424 = scalar_lea.hbm %s1, %s423
      %s425 = scalar_lea.vmem [#allocation2], %s422
      // Predicated region
      $region102: #{tpu_custom_call.1} parent=72 // pred_check
        _
      $region103: #{tpu_custom_call.1} parent=72 // pred_check_branch
        %427 = sbr.rel target = $region105
      $region104: #{tpu_custom_call.1} parent=72 // pred_region
        %428 = sst [smem:[#allocation10]] [#allocation57]
        %429 = sst [smem:[#allocation11]] [#allocation56]
      $region105: #{tpu_custom_call.1} parent=72 // pred_fallthru
        _
      %431 = shalt.err (0)
      %s433 = sshll.u32 %s425, 4
      %s434 = int_to_ptr.vmem [resolvable:$true] %s433
      %436 = dma.hbm_to_vmem [thread:$0]  %s424, 16, %s434, %s306
      %s437 = sadd.s32 %s300, 8
      %s438 = sld [smem:[#allocation5 + %s437]]
      %s439 = sadd.s32 %s301, 8
      %s440 = smul.addr %s438, 16
      %s441 = scalar_lea.hbm %s1, %s440
      %s442 = scalar_lea.vmem [#allocation2], %s439
      // Predicated region
      $region106: #{tpu_custom_call.1} parent=72 // pred_check
        _
      $region107: #{tpu_custom_call.1} parent=72 // pred_check_branch
        %444 = sbr.rel target = $region109
      $region108: #{tpu_custom_call.1} parent=72 // pred_region
        %445 = sst [smem:[#allocation10]] [#allocation59]
        %446 = sst [smem:[#allocation11]] [#allocation58]
      $region109: #{tpu_custom_call.1} parent=72 // pred_fallthru
        _
      %448 = shalt.err (0)
      %s450 = sshll.u32 %s442, 4
      %s451 = int_to_ptr.vmem [resolvable:$true] %s450
      %453 = dma.hbm_to_vmem [thread:$0]  %s441, 16, %s451, %s306
      %s454 = sadd.s32 %s300, 9
      %s455 = sld [smem:[#allocation5 + %s454]]
      %s456 = sadd.s32 %s301, 9
      %s457 = smul.addr %s455, 16
      %s458 = scalar_lea.hbm %s1, %s457
      %s459 = scalar_lea.vmem [#allocation2], %s456
      // Predicated region
      $region110: #{tpu_custom_call.1} parent=72 // pred_check
        _
      $region111: #{tpu_custom_call.1} parent=72 // pred_check_branch
        %461 = sbr.rel target = $region113
      $region112: #{tpu_custom_call.1} parent=72 // pred_region
        %462 = sst [smem:[#allocation10]] [#allocation61]
        %463 = sst [smem:[#allocation11]] [#allocation60]
      $region113: #{tpu_custom_call.1} parent=72 // pred_fallthru
        _
      %465 = shalt.err (0)
      %s467 = sshll.u32 %s459, 4
      %s468 = int_to_ptr.vmem [resolvable:$true] %s467
      %470 = dma.hbm_to_vmem [thread:$0]  %s458, 16, %s468, %s306
      %s471 = sadd.s32 %s300, 10
      %s472 = sld [smem:[#allocation5 + %s471]]
      %s473 = sadd.s32 %s301, 10
      %s474 = smul.addr %s472, 16
      %s475 = scalar_lea.hbm %s1, %s474
      %s476 = scalar_lea.vmem [#allocation2], %s473
      // Predicated region
      $region114: #{tpu_custom_call.1} parent=72 // pred_check
        _
      $region115: #{tpu_custom_call.1} parent=72 // pred_check_branch
        %478 = sbr.rel target = $region117
      $region116: #{tpu_custom_call.1} parent=72 // pred_region
        %479 = sst [smem:[#allocation10]] [#allocation63]
        %480 = sst [smem:[#allocation11]] [#allocation62]
      $region117: #{tpu_custom_call.1} parent=72 // pred_fallthru
        _
      %482 = shalt.err (0)
      %s484 = sshll.u32 %s476, 4
      %s485 = int_to_ptr.vmem [resolvable:$true] %s484
      %487 = dma.hbm_to_vmem [thread:$0]  %s475, 16, %s485, %s306
      %s488 = sadd.s32 %s300, 11
      %s489 = sld [smem:[#allocation5 + %s488]]
      %s490 = sadd.s32 %s301, 11
      %s491 = smul.addr %s489, 16
      %s492 = scalar_lea.hbm %s1, %s491
      %s493 = scalar_lea.vmem [#allocation2], %s490
      // Predicated region
      $region118: #{tpu_custom_call.1} parent=72 // pred_check
        _
      $region119: #{tpu_custom_call.1} parent=72 // pred_check_branch
        %495 = sbr.rel target = $region121
      $region120: #{tpu_custom_call.1} parent=72 // pred_region
        %496 = sst [smem:[#allocation10]] [#allocation65]
        %497 = sst [smem:[#allocation11]] [#allocation64]
      $region121: #{tpu_custom_call.1} parent=72 // pred_fallthru
        _
      %499 = shalt.err (0)
      %s501 = sshll.u32 %s493, 4
      %s502 = int_to_ptr.vmem [resolvable:$true] %s501
      %504 = dma.hbm_to_vmem [thread:$0]  %s492, 16, %s502, %s306
      %s505 = sadd.s32 %s300, 12
      %s506 = sld [smem:[#allocation5 + %s505]]
      %s507 = sadd.s32 %s301, 12
      %s508 = smul.addr %s506, 16
      %s509 = scalar_lea.hbm %s1, %s508
      %s510 = scalar_lea.vmem [#allocation2], %s507
      // Predicated region
      $region122: #{tpu_custom_call.1} parent=72 // pred_check
        _
      $region123: #{tpu_custom_call.1} parent=72 // pred_check_branch
        %512 = sbr.rel target = $region125
      $region124: #{tpu_custom_call.1} parent=72 // pred_region
        %513 = sst [smem:[#allocation10]] [#allocation67]
        %514 = sst [smem:[#allocation11]] [#allocation66]
      $region125: #{tpu_custom_call.1} parent=72 // pred_fallthru
        _
      %516 = shalt.err (0)
      %s518 = sshll.u32 %s510, 4
      %s519 = int_to_ptr.vmem [resolvable:$true] %s518
      %521 = dma.hbm_to_vmem [thread:$0]  %s509, 16, %s519, %s306
      %s522 = sadd.s32 %s300, 13
      %s523 = sld [smem:[#allocation5 + %s522]]
      %s524 = sadd.s32 %s301, 13
      %s525 = smul.addr %s523, 16
      %s526 = scalar_lea.hbm %s1, %s525
      %s527 = scalar_lea.vmem [#allocation2], %s524
      // Predicated region
      $region126: #{tpu_custom_call.1} parent=72 // pred_check
        _
      $region127: #{tpu_custom_call.1} parent=72 // pred_check_branch
        %529 = sbr.rel target = $region129
      $region128: #{tpu_custom_call.1} parent=72 // pred_region
        %530 = sst [smem:[#allocation10]] [#allocation69]
        %531 = sst [smem:[#allocation11]] [#allocation68]
      $region129: #{tpu_custom_call.1} parent=72 // pred_fallthru
        _
      %533 = shalt.err (0)
      %s535 = sshll.u32 %s527, 4
      %s536 = int_to_ptr.vmem [resolvable:$true] %s535
      %538 = dma.hbm_to_vmem [thread:$0]  %s526, 16, %s536, %s306
      %s539 = sadd.s32 %s300, 14
      %s540 = sld [smem:[#allocation5 + %s539]]
      %s541 = sadd.s32 %s301, 14
      %s542 = smul.addr %s540, 16
      %s543 = scalar_lea.hbm %s1, %s542
      %s544 = scalar_lea.vmem [#allocation2], %s541
      // Predicated region
      $region130: #{tpu_custom_call.1} parent=72 // pred_check
        _
      $region131: #{tpu_custom_call.1} parent=72 // pred_check_branch
        %546 = sbr.rel target = $region133
      $region132: #{tpu_custom_call.1} parent=72 // pred_region
        %547 = sst [smem:[#allocation10]] [#allocation71]
        %548 = sst [smem:[#allocation11]] [#allocation70]
      $region133: #{tpu_custom_call.1} parent=72 // pred_fallthru
        _
      %550 = shalt.err (0)
      %s552 = sshll.u32 %s544, 4
      %s553 = int_to_ptr.vmem [resolvable:$true] %s552
      %555 = dma.hbm_to_vmem [thread:$0]  %s543, 16, %s553, %s306
      %s556 = sadd.s32 %s300, 15
      %s557 = sld [smem:[#allocation5 + %s556]]
      %s558 = sadd.s32 %s301, 15
      %s559 = smul.addr %s557, 16
      %s560 = scalar_lea.hbm %s1, %s559
      %s561 = scalar_lea.vmem [#allocation2], %s558
      // Predicated region
      $region134: #{tpu_custom_call.1} parent=72 // pred_check
        _
      $region135: #{tpu_custom_call.1} parent=72 // pred_check_branch
        %563 = sbr.rel target = $region137
      $region136: #{tpu_custom_call.1} parent=72 // pred_region
        %564 = sst [smem:[#allocation10]] [#allocation73]
        %565 = sst [smem:[#allocation11]] [#allocation72]
      $region137: #{tpu_custom_call.1} parent=72 // pred_fallthru
        _
      %567 = shalt.err (0)
      %s569 = sshll.u32 %s561, 4
      %s570 = int_to_ptr.vmem [resolvable:$true] %s569
      %572 = dma.hbm_to_vmem [thread:$0]  %s560, 16, %s570, %s306
    $region73: #{tpu_custom_call.1} parent=1 // pred_fallthru
      _
    %s573 = scalar_lea.sflag [#allocation3], %s15
    %s574 = smul.u32 1, 1
    %s575 = sshll.u32 %s574, 4
    %576 = dma.done %s573, %s575
    %s577 = sshll.u32 %s574, 4
    %578 = dma.done %s573, %s577
    %s579 = sshll.u32 %s574, 4
    %580 = dma.done %s573, %s579
    %s581 = sshll.u32 %s574, 4
    %582 = dma.done %s573, %s581
    %s583 = sshll.u32 %s574, 4
    %584 = dma.done %s573, %s583
    %s585 = sshll.u32 %s574, 4
    %586 = dma.done %s573, %s585
    %s587 = sshll.u32 %s574, 4
    %588 = dma.done %s573, %s587
    %s589 = sshll.u32 %s574, 4
    %590 = dma.done %s573, %s589
    %s591 = sshll.u32 %s574, 4
    %592 = dma.done %s573, %s591
    %s593 = sshll.u32 %s574, 4
    %594 = dma.done %s573, %s593
    %s595 = sshll.u32 %s574, 4
    %596 = dma.done %s573, %s595
    %s597 = sshll.u32 %s574, 4
    %598 = dma.done %s573, %s597
    %s599 = sshll.u32 %s574, 4
    %600 = dma.done %s573, %s599
    %s601 = sshll.u32 %s574, 4
    %602 = dma.done %s573, %s601
    %s603 = sshll.u32 %s574, 4
    %604 = dma.done %s573, %s603
    %s605 = sshll.u32 %s574, 4
    %606 = dma.done %s573, %s605
    %s607 = smul.u32 %s15, 16
    %s608 = scalar_lea.vmem [#allocation2], %s607
    %v609 = vld [vmem:[%s608] sm:$0xff]
    %v610 = vld [vmem:[%s608 + $0x8] sm:$0xff]
    %v611 = vmul.f32 %v609, 11.313708
    %v612 = vmul.f32 %v610, 11.313708
    %613 = vst [vmem:[#allocation6] sm:$0xff] %v611
    %614 = vst [vmem:[#allocation6 + $0x8] sm:$0xff] %v612
    // Predicated region
    $region138: #{tpu_custom_call.1} parent=1 // pred_check
      _
    $region139: #{tpu_custom_call.1} parent=1 // pred_check_branch
      %616 = sbr.rel (0) target = $region141
    $region140: #{tpu_custom_call.1} parent=1 // pred_region
      %s617 = sadd.s32 0, 0
      %s618 = smul.u32 2, %s617
      %s620 = ssub.s32 256, 256
      %621 = vsyncadd [#allocation7], %s620
      %s622 = smul.addr %s618, 128
      %s623 = scalar_lea.hbm %s2, %s622
      %s624 = sshll.u32 [#allocation6], 4
      %s625 = int_to_ptr.vmem [resolvable:$true] %s624
      %630 = dma.vmem_to_hbm [thread:$0]  %s625, 256, %s623, [#allocation7], 128, 128, 8
    $region141: #{tpu_custom_call.1} parent=1 // pred_fallthru
      _
    // Predicated region
    $region142: #{tpu_custom_call.1} parent=1 // pred_check
      _
    $region143: #{tpu_custom_call.1} parent=1 // pred_check_branch
      %632 = sbr.rel (0) target = $region145
    $region144: #{tpu_custom_call.1} parent=1 // pred_region
      %633 = dma.done [#allocation7], 256
    $region145: #{tpu_custom_call.1} parent=1 // pred_fallthru
      _
    %634 = vsyncpa [#allocation7], 1
  %635 = vsyncmov [#allocation3]
  %s636 = vpop.sfrf %635
  %p637 = scmp.eq.s32.totalorder %s636, 0
  %p638 = pneg %p637
  %640 = shalt.err (%p638)
  %s641 = scalar_lea.sflag [#allocation3], 1
  %642 = vsyncmov %s641
  %s643 = vpop.sfrf %642
  %p644 = scmp.eq.s32.totalorder %s643, 0
  %p645 = pneg %p644
  %647 = shalt.err (%p645)

</llo_original>
